<compile_context>
chip_gen: v5e
topology: v5e:2x2
jax: 0.10.0
libtpu: 0.0.40
codegen_flags: <defaults>
</compile_context>

<pallas_src>
import jax
import jax.numpy as jnp
from jax.experimental import pallas as pl
from jax.experimental.pallas import tpu as pltpu


def _round_up(x, m):
    return ((x + m - 1) // m) * m


def _choose_tile(M, target=512, min_steps=2):
    """Rows per conv grid step: multiple of 16 (bf16 sublane packing), aiming
    for `target` but forcing at least `min_steps` grid steps (v7x megacore)."""
    tm = -(-M // min_steps)                       # ceil(M / min_steps)
    tm = _round_up(max(tm, 16), 16)
    tm = min(tm, _round_up(target, 16))
    Mp = _round_up(M, tm)
    return tm, Mp


# ----------------------------- Pallas kernels ------------------------------ #

def _conv_relu_pool_kernel(p_ref, w_ref, b_ref, o_ref):
    """Fused conv (im2col matmul) + bias + ReLU + 2x2 max-pool for one M-tile.

    p_ref: (4, TM, K) bf16 -- axis 0 = the four conv-output positions inside
                              each 2x2 pool window; TM rows = (b, ph, pw).
    w_ref: (K, C) bf16;  b_ref: (1, C) f32;  o_ref: (TM, C) f32.

    Uses maxpool(relu(conv + b)) == relu(max_q(p_q @ W) + b)  (bias is shared
    across the 4 window positions and ReLU is monotone).  Each p_ref[q] is
    loaded per-dot so the full 4x block is never live in vregs at once.
    """
    w = w_ref[...]
    y = jnp.dot(p_ref[0], w, preferred_element_type=jnp.float32)
    for q in range(1, 4):                          # static unroll; pool fused here
        y = jnp.maximum(y, jnp.dot(p_ref[q], w, preferred_element_type=jnp.float32))
    o_ref[...] = jnp.maximum(y + b_ref[...], 0.0).astype(o_ref.dtype)


def _mlp_kernel(x_ref, w1_ref, b1_ref, w2_ref, b2_ref, w3_ref, b3_ref, o_ref):
    """fc1 -> ReLU -> fc2 -> ReLU -> fc3, fully fused; hidden activations never
    leave VMEM."""
    h = jnp.dot(x_ref[...], w1_ref[...], preferred_element_type=jnp.float32)
    h = jnp.maximum(h + b1_ref[...], 0.0)
    h = jnp.dot(h, w2_ref[...], preferred_element_type=jnp.float32)
    h = jnp.maximum(h + b2_ref[...], 0.0)
    y = jnp.dot(h, w3_ref[...], preferred_element_type=jnp.float32) + b3_ref[...]
    o_ref[...] = y.astype(o_ref.dtype)


# ----------------------------- Pallas wrappers ----------------------------- #

def pallas_conv_relu_pool(patches, w_mat, b, tm):
    """patches: (4, Mp, K) bf16; w_mat: (K, C) bf16; b: (C,) f32 -> (Mp, C) f32."""
    four, Mp, K = patches.shape
    assert four == 4 and Mp % tm == 0
    C = w_mat.shape[1]
    b2 = b.reshape(1, C).astype(jnp.float32)
    return pl.pallas_call(
        _conv_relu_pool_kernel,
        grid=(Mp // tm,),                              # M-tiled over (b, ph, pw) rows
        in_specs=[
            pl.BlockSpec((4, tm, K), lambda i: (0, i, 0)),
            pl.BlockSpec((K, C), lambda i: (0, 0)),
            pl.BlockSpec((1, C), lambda i: (0, 0)),
        ],
        out_specs=pl.BlockSpec((tm, C), lambda i: (i, 0)),
        out_shape=jax.ShapeDtypeStruct((Mp, C), jnp.float32),
        compiler_params=pltpu.CompilerParams(
            dimension_semantics=("parallel",)),        # shard over TCs on v7x
    )(patches, w_mat, b2)


def pallas_mlp(x, w1, b1, w2, b2, w3, b3, n_out):
    """Fused 3-layer MLP head. x: (B, 400) -> (B, n_out). w3/b3 are lane-padded."""
    B, K1 = x.shape
    N1, N2, N3 = w1.shape[1], w2.shape[1], w3.shape[1]

    # >=2 batch tiles when there is enough work (v7x megacore); pad to sublanes.
    if B >= 16:
        TB = min(256, _round_up(-(-B // 2), 8))
    else:
        TB = _round_up(max(B, 8), 8)
    Bp = _round_up(B, TB)
    if Bp != B:
        x = jnp.pad(x, ((0, Bp - B), (0, 0)))

    out = pl.pallas_call(
        _mlp_kernel,
        grid=(Bp // TB,),
        in_specs=[
            pl.BlockSpec((TB, K1), lambda i: (i, 0)),
            pl.BlockSpec((K1, N1), lambda i: (0, 0)),
            pl.BlockSpec((1, N1), lambda i: (0, 0)),
            pl.BlockSpec((N1, N2), lambda i: (0, 0)),
            pl.BlockSpec((1, N2), lambda i: (0, 0)),
            pl.BlockSpec((N2, N3), lambda i: (0, 0)),
            pl.BlockSpec((1, N3), lambda i: (0, 0)),
        ],
        out_specs=pl.BlockSpec((TB, N3), lambda i: (i, 0)),
        out_shape=jax.ShapeDtypeStruct((Bp, N3), jnp.float32),
        compiler_params=pltpu.CompilerParams(
            dimension_semantics=("parallel",)),
    )(x, w1, b1.reshape(1, N1), w2, b2.reshape(1, N2), w3, b3.reshape(1, N3))
    return out[:B, :n_out]


# ------------------------- Layout plumbing (XLA) ---------------------------- #

def pool_im2col_nhwc(x, kh, kw):
    """x: (B,H,W,C) -> patches (4, B*PH*PW, kh*kw*C) via strided slices.

    Axis 0 enumerates the four conv-output positions of each 2x2 pool window
    (q = 2*di + dj); patch columns are ordered (kh, kw, cin) to match
    conv_weight_to_matrix.  No stack+6D-transpose: each (i,j,di,dj) is a single
    stride-2 slice.
    """
    B, H, W, C = x.shape
    OH, OW = H - kh + 1, W - kw + 1
    PH, PW = OH // 2, OW // 2
    qs = []
    for di in range(2):
        for dj in range(2):
            cols = []
            for i in range(kh):
                for j in range(kw):
                    r0, c0 = di + i, dj + j
                    cols.append(x[:, r0:r0 + 2 * PH - 1:2,
                                     c0:c0 + 2 * PW - 1:2, :])   # (B, PH, PW, C)
            q = jnp.concatenate(cols, axis=-1)                   # (B, PH, PW, kh*kw*C)
            qs.append(q.reshape(B * PH * PW, kh * kw * C))
    return jnp.stack(qs, axis=0), (PH, PW)                       # (4, M, K)


def conv_weight_to_matrix(w_pt):
    """PyTorch conv weight (Cout, Cin, KH, KW) -> (KH*KW*Cin, Cout)."""
    Cout, Cin, KH, KW = w_pt.shape
    return jnp.transpose(w_pt, (2, 3, 1, 0)).reshape(KH * KW * Cin, Cout)


# ------------------------------- Parameters -------------------------------- #

def init_params(key):
    """PyTorch-layout parameters (same init distribution as nn.Conv2d/Linear)."""
    def u(k, shape, fan_in):
        bound = 1.0 / jnp.sqrt(jnp.float32(fan_in))
        return jax.random.uniform(k, shape, jnp.float32, -bound, bound)

    ks = jax.random.split(key, 10)
    return {
        "conv1_w": u(ks[0], (6, 3, 5, 5), 3 * 5 * 5),
        "conv1_b": u(ks[1], (6,), 3 * 5 * 5),
        "conv2_w": u(ks[2], (16, 6, 5, 5), 6 * 5 * 5),
        "conv2_b": u(ks[3], (16,), 6 * 5 * 5),
        "fc1_w": u(ks[4], (120, 16 * 5 * 5), 16 * 5 * 5),   # PyTorch Linear: (out, in)
        "fc1_b": u(ks[5], (120,), 16 * 5 * 5),
        "fc2_w": u(ks[6], (84, 120), 120),
        "fc2_b": u(ks[7], (84,), 120),
        "fc3_w": u(ks[8], (10, 84), 84),
        "fc3_b": u(ks[9], (10,), 84),
    }


def prepare_params(params):
    """One-time layout transforms (no per-forward transposes).

    * conv weights -> im2col matrices, bf16 (matmul inputs; accumulation stays f32).
    * fc1 weight rows permuted from PyTorch's (C,H,W) flatten order to NHWC
      (H,W,C) order so the flatten transpose disappears from the forward pass.
    * fc3 zero-padded to 128 output columns (lane-dense stores); sliced to 10
      in the wrapper.
    """
    fc1_w = params["fc1_w"].reshape(120, 16, 5, 5)               # (out, c, h, w)
    fc1_w = jnp.transpose(fc1_w, (2, 3, 1, 0)).reshape(400, 120)  # rows (h, w, c)
    fc3_w = jnp.pad(params["fc3_w"].T, ((0, 0), (0, 128 - 10)))   # (84, 128)
    fc3_b = jnp.pad(params["fc3_b"], (0, 128 - 10))               # (128,)
    return {
        "conv1_w": conv_weight_to_matrix(params["conv1_w"]).astype(jnp.bfloat16),
        "conv1_b": params["conv1_b"],
        "conv2_w": conv_weight_to_matrix(params["conv2_w"]).astype(jnp.bfloat16),
        "conv2_b": params["conv2_b"],
        "fc1_w": fc1_w,                                           # (400, 120) f32
        "fc1_b": params["fc1_b"],
        "fc2_w": params["fc2_w"].T,                               # (120, 84) f32
        "fc2_b": params["fc2_b"],
        "fc3_w": fc3_w,
        "fc3_b": fc3_b,
    }


# -------------------------------- Forward ---------------------------------- #

def net_forward(prm, x_nchw):
    """x_nchw: (B, 3, 32, 32) float32 -> logits (B, 10)."""
    B = x_nchw.shape[0]
    x = jnp.transpose(x_nchw, (0, 2, 3, 1)).astype(jnp.bfloat16)    # NHWC bf16

    # conv1 (3->6, k=5) + ReLU + max_pool 2x2 : single fused, M-tiled kernel
    p1, (PH1, PW1) = pool_im2col_nhwc(x, 5, 5)                      # (4, B*196, 75)
    M1 = p1.shape[1]
    tm1, Mp1 = _choose_tile(M1)
    if Mp1 != M1:
        p1 = jnp.pad(p1, ((0, 0), (0, Mp1 - M1), (0, 0)))
    y1 = pallas_conv_relu_pool(p1, prm["conv1_w"], prm["conv1_b"], tm1)  # (Mp1, 6)
    x1 = y1[:M1].reshape(B, PH1, PW1, 6).astype(jnp.bfloat16)       # NHWC (B,14,14,6)

    # conv2 (6->16, k=5) + ReLU + max_pool 2x2 : single fused, M-tiled kernel
    p2, (PH2, PW2) = pool_im2col_nhwc(x1, 5, 5)                     # (4, B*25, 150)
    M2 = p2.shape[1]
    tm2, Mp2 = _choose_tile(M2)
    if Mp2 != M2:
        p2 = jnp.pad(p2, ((0, 0), (0, Mp2 - M2), (0, 0)))
    y2 = pallas_conv_relu_pool(p2, prm["conv2_w"], prm["conv2_b"], tm2)  # (Mp2, 16)

    # flatten: y2 rows are ordered (b, ph, pw) with channels last -> (h, w, c)
    # flatten order; fc1_w rows were permuted to match, so no transpose needed.
    flat = y2[:M2].reshape(B, PH2 * PW2 * 16)                       # (B, 400)

    # fc1 -> ReLU -> fc2 -> ReLU -> fc3 : single fused Pallas kernel
    return pallas_mlp(flat, prm["fc1_w"], prm["fc1_b"],
                      prm["fc2_w"], prm["fc2_b"],
                      prm["fc3_w"], prm["fc3_b"], n_out=10)         # (B, 10)


# ---------------------------------- Main ------------------------------------ #

if __name__ == "__main__":
    key = jax.random.PRNGKey(0)
    pkey, xkey = jax.random.split(key)
    params = prepare_params(init_params(pkey))

    # Input consistent with the module: fc1 expects 16*5*5 => input must be 32x32.
    x = jax.random.normal(xkey, (2, 3, 32, 32), dtype=jnp.float32)

    fwd = jax.jit(net_forward)
    logits = jax.block_until_ready(fwd(params, x))
    assert logits.shape == (2, 10)
    print("KERNEL_OK")
</pallas_src>

<mosaic_0001>
module attributes {stable_mosaic.version = 11 : i64} {
  func.func @_conv_relu_pool_kernel(%arg0: i32, %arg1: memref<4x208x75xbf16, #tpu.memory_space<vmem>>, %arg2: memref<75x6xbf16, #tpu.memory_space<vmem>>, %arg3: memref<1x6xf32, #tpu.memory_space<vmem>>, %arg4: memref<208x6xf32, #tpu.memory_space<vmem>>) attributes {dimension_semantics = [#tpu.dimension_semantics<parallel>], iteration_bounds = array<i64: 2>, scalar_prefetch = 0 : i64, scratch_operands = 0 : i64, tpu.core_type = #tpu.core_type<tc>, window_params = [{transform_indices = @transform_0, window_bounds = array<i64: 4, 208, 75>}, {pipeline_mode = #tpu.pipeline_mode<synchronous>, transform_indices = @transform_1, window_bounds = array<i64: 75, 6>}, {pipeline_mode = #tpu.pipeline_mode<synchronous>, transform_indices = @transform_2, window_bounds = array<i64: 1, 6>}, {transform_indices = @transform_3, window_bounds = array<i64: 208, 6>}]} {
    %c0 = arith.constant 0 : index
    %c0_0 = arith.constant 0 : index
    %0 = vector.load %arg2[%c0, %c0_0] : memref<75x6xbf16, #tpu.memory_space<vmem>>, vector<75x6xbf16>
    %c0_1 = arith.constant 0 : index
    %c0_2 = arith.constant 0 : index
    %c0_3 = arith.constant 0 : index
    %1 = vector.load %arg1[%c0_1, %c0_2, %c0_3] : memref<4x208x75xbf16, #tpu.memory_space<vmem>>, vector<1x208x75xbf16>
    %2 = vector.shape_cast %1 : vector<1x208x75xbf16> to vector<208x75xbf16>
    %cst = arith.constant dense<0.000000e+00> : vector<208x6xf32>
    %3 = tpu.matmul %2, %0, %cst {dimension_numbers = #tpu.dot_dimension_numbers<[1], [0], [0], [1], [0, 0, 1, 1], [], []>} : vector<208x75xbf16>, vector<75x6xbf16>, vector<208x6xf32> -> vector<208x6xf32>
    %c1 = arith.constant 1 : index
    %c0_4 = arith.constant 0 : index
    %c0_5 = arith.constant 0 : index
    %4 = vector.load %arg1[%c1, %c0_4, %c0_5] : memref<4x208x75xbf16, #tpu.memory_space<vmem>>, vector<1x208x75xbf16>
    %5 = vector.shape_cast %4 : vector<1x208x75xbf16> to vector<208x75xbf16>
    %cst_6 = arith.constant dense<0.000000e+00> : vector<208x6xf32>
    %6 = tpu.matmul %5, %0, %cst_6 {dimension_numbers = #tpu.dot_dimension_numbers<[1], [0], [0], [1], [0, 0, 1, 1], [], []>} : vector<208x75xbf16>, vector<75x6xbf16>, vector<208x6xf32> -> vector<208x6xf32>
    %7 = arith.maximumf %3, %6 : vector<208x6xf32>
    %c2 = arith.constant 2 : index
    %c0_7 = arith.constant 0 : index
    %c0_8 = arith.constant 0 : index
    %8 = vector.load %arg1[%c2, %c0_7, %c0_8] : memref<4x208x75xbf16, #tpu.memory_space<vmem>>, vector<1x208x75xbf16>
    %9 = vector.shape_cast %8 : vector<1x208x75xbf16> to vector<208x75xbf16>
    %cst_9 = arith.constant dense<0.000000e+00> : vector<208x6xf32>
    %10 = tpu.matmul %9, %0, %cst_9 {dimension_numbers = #tpu.dot_dimension_numbers<[1], [0], [0], [1], [0, 0, 1, 1], [], []>} : vector<208x75xbf16>, vector<75x6xbf16>, vector<208x6xf32> -> vector<208x6xf32>
    %11 = arith.maximumf %7, %10 : vector<208x6xf32>
    %c3 = arith.constant 3 : index
    %c0_10 = arith.constant 0 : index
    %c0_11 = arith.constant 0 : index
    %12 = vector.load %arg1[%c3, %c0_10, %c0_11] : memref<4x208x75xbf16, #tpu.memory_space<vmem>>, vector<1x208x75xbf16>
    %13 = vector.shape_cast %12 : vector<1x208x75xbf16> to vector<208x75xbf16>
    %cst_12 = arith.constant dense<0.000000e+00> : vector<208x6xf32>
    %14 = tpu.matmul %13, %0, %cst_12 {dimension_numbers = #tpu.dot_dimension_numbers<[1], [0], [0], [1], [0, 0, 1, 1], [], []>} : vector<208x75xbf16>, vector<75x6xbf16>, vector<208x6xf32> -> vector<208x6xf32>
    %15 = arith.maximumf %11, %14 : vector<208x6xf32>
    %c0_13 = arith.constant 0 : index
    %c0_14 = arith.constant 0 : index
    %16 = vector.load %arg3[%c0_13, %c0_14] : memref<1x6xf32, #tpu.memory_space<vmem>>, vector<1x6xf32>
    %17 = vector.broadcast %16 : vector<1x6xf32> to vector<208x6xf32>
    %18 = arith.addf %15, %17 : vector<208x6xf32>
    %cst_15 = arith.constant 0.000000e+00 : f32
    %19 = vector.broadcast %cst_15 : f32 to vector<208x6xf32>
    %20 = arith.maximumf %18, %19 : vector<208x6xf32>
    %c0_16 = arith.constant 0 : index
    %c0_17 = arith.constant 0 : index
    %21 = vector.load %arg4[%c0_16, %c0_17] : memref<208x6xf32, #tpu.memory_space<vmem>>, vector<208x6xf32>
    tpu.vector_store %arg4[%c0_16, %c0_17], %20 {strides = array<i32>} : memref<208x6xf32, #tpu.memory_space<vmem>>, vector<208x6xf32>,
    return
  }
  func.func @transform_0(%arg0: i32) -> (i32, i32, i32) {
    %c0_i32 = arith.constant 0 : i32
    %c0_i32_0 = arith.constant 0 : i32
    %c0_i32_1 = arith.constant 0 : i32
    return %c0_i32, %arg0, %c0_i32_0 : i32, i32, i32
  }
  func.func @transform_1(%arg0: i32) -> (i32, i32) {
    %c0_i32 = arith.constant 0 : i32
    %c0_i32_0 = arith.constant 0 : i32
    %c0_i32_1 = arith.constant 0 : i32
    return %c0_i32, %c0_i32_0 : i32, i32
  }
  func.func @transform_2(%arg0: i32) -> (i32, i32) {
    %c0_i32 = arith.constant 0 : i32
    %c0_i32_0 = arith.constant 0 : i32
    %c0_i32_1 = arith.constant 0 : i32
    return %c0_i32, %c0_i32_0 : i32, i32
  }
  func.func @transform_3(%arg0: i32) -> (i32, i32) {
    %c0_i32 = arith.constant 0 : i32
    %c0_i32_0 = arith.constant 0 : i32
    return %arg0, %c0_i32 : i32, i32
  }
}

module attributes {stable_mosaic.version = 11 : i64} {
  func.func @_conv_relu_pool_kernel(%arg0: i32, %arg1: memref<4x32x150xbf16, #tpu.memory_space<vmem>>, %arg2: memref<150x16xbf16, #tpu.memory_space<vmem>>, %arg3: memref<1x16xf32, #tpu.memory_space<vmem>>, %arg4: memref<32x16xf32, #tpu.memory_space<vmem>>) attributes {dimension_semantics = [#tpu.dimension_semantics<parallel>], iteration_bounds = array<i64: 2>, scalar_prefetch = 0 : i64, scratch_operands = 0 : i64, tpu.core_type = #tpu.core_type<tc>, window_params = [{transform_indices = @transform_0, window_bounds = array<i64: 4, 32, 150>}, {pipeline_mode = #tpu.pipeline_mode<synchronous>, transform_indices = @transform_1, window_bounds = array<i64: 150, 16>}, {pipeline_mode = #tpu.pipeline_mode<synchronous>, transform_indices = @transform_2, window_bounds = array<i64: 1, 16>}, {transform_indices = @transform_3, window_bounds = array<i64: 32, 16>}]} {
    %c0 = arith.constant 0 : index
    %c0_0 = arith.constant 0 : index
    %0 = vector.load %arg2[%c0, %c0_0] : memref<150x16xbf16, #tpu.memory_space<vmem>>, vector<150x16xbf16>
    %c0_1 = arith.constant 0 : index
    %c0_2 = arith.constant 0 : index
    %c0_3 = arith.constant 0 : index
    %1 = vector.load %arg1[%c0_1, %c0_2, %c0_3] : memref<4x32x150xbf16, #tpu.memory_space<vmem>>, vector<1x32x150xbf16>
    %2 = vector.shape_cast %1 : vector<1x32x150xbf16> to vector<32x150xbf16>
    %cst = arith.constant dense<0.000000e+00> : vector<32x16xf32>
    %3 = tpu.matmul %2, %0, %cst {dimension_numbers = #tpu.dot_dimension_numbers<[1], [0], [0], [1], [0, 0, 1, 1], [], []>} : vector<32x150xbf16>, vector<150x16xbf16>, vector<32x16xf32> -> vector<32x16xf32>
    %c1 = arith.constant 1 : index
    %c0_4 = arith.constant 0 : index
    %c0_5 = arith.constant 0 : index
    %4 = vector.load %arg1[%c1, %c0_4, %c0_5] : memref<4x32x150xbf16, #tpu.memory_space<vmem>>, vector<1x32x150xbf16>
    %5 = vector.shape_cast %4 : vector<1x32x150xbf16> to vector<32x150xbf16>
    %cst_6 = arith.constant dense<0.000000e+00> : vector<32x16xf32>
    %6 = tpu.matmul %5, %0, %cst_6 {dimension_numbers = #tpu.dot_dimension_numbers<[1], [0], [0], [1], [0, 0, 1, 1], [], []>} : vector<32x150xbf16>, vector<150x16xbf16>, vector<32x16xf32> -> vector<32x16xf32>
    %7 = arith.maximumf %3, %6 : vector<32x16xf32>
    %c2 = arith.constant 2 : index
    %c0_7 = arith.constant 0 : index
    %c0_8 = arith.constant 0 : index
    %8 = vector.load %arg1[%c2, %c0_7, %c0_8] : memref<4x32x150xbf16, #tpu.memory_space<vmem>>, vector<1x32x150xbf16>
    %9 = vector.shape_cast %8 : vector<1x32x150xbf16> to vector<32x150xbf16>
    %cst_9 = arith.constant dense<0.000000e+00> : vector<32x16xf32>
    %10 = tpu.matmul %9, %0, %cst_9 {dimension_numbers = #tpu.dot_dimension_numbers<[1], [0], [0], [1], [0, 0, 1, 1], [], []>} : vector<32x150xbf16>, vector<150x16xbf16>, vector<32x16xf32> -> vector<32x16xf32>
    %11 = arith.maximumf %7, %10 : vector<32x16xf32>
    %c3 = arith.constant 3 : index
    %c0_10 = arith.constant 0 : index
    %c0_11 = arith.constant 0 : index
    %12 = vector.load %arg1[%c3, %c0_10, %c0_11] : memref<4x32x150xbf16, #tpu.memory_space<vmem>>, vector<1x32x150xbf16>
    %13 = vector.shape_cast %12 : vector<1x32x150xbf16> to vector<32x150xbf16>
    %cst_12 = arith.constant dense<0.000000e+00> : vector<32x16xf32>
    %14 = tpu.matmul %13, %0, %cst_12 {dimension_numbers = #tpu.dot_dimension_numbers<[1], [0], [0], [1], [0, 0, 1, 1], [], []>} : vector<32x150xbf16>, vector<150x16xbf16>, vector<32x16xf32> -> vector<32x16xf32>
    %15 = arith.maximumf %11, %14 : vector<32x16xf32>
    %c0_13 = arith.constant 0 : index
    %c0_14 = arith.constant 0 : index
    %16 = vector.load %arg3[%c0_13, %c0_14] : memref<1x16xf32, #tpu.memory_space<vmem>>, vector<1x16xf32>
    %17 = vector.broadcast %16 : vector<1x16xf32> to vector<32x16xf32>
    %18 = arith.addf %15, %17 : vector<32x16xf32>
    %cst_15 = arith.constant 0.000000e+00 : f32
    %19 = vector.broadcast %cst_15 : f32 to vector<32x16xf32>
    %20 = arith.maximumf %18, %19 : vector<32x16xf32>
    %c0_16 = arith.constant 0 : index
    %c0_17 = arith.constant 0 : index
    %21 = vector.load %arg4[%c0_16, %c0_17] : memref<32x16xf32, #tpu.memory_space<vmem>>, vector<32x16xf32>
    tpu.vector_store %arg4[%c0_16, %c0_17], %20 {strides = array<i32>} : memref<32x16xf32, #tpu.memory_space<vmem>>, vector<32x16xf32>,
    return
  }
  func.func @transform_0(%arg0: i32) -> (i32, i32, i32) {
    %c0_i32 = arith.constant 0 : i32
    %c0_i32_0 = arith.constant 0 : i32
    %c0_i32_1 = arith.constant 0 : i32
    return %c0_i32, %arg0, %c0_i32_0 : i32, i32, i32
  }
  func.func @transform_1(%arg0: i32) -> (i32, i32) {
    %c0_i32 = arith.constant 0 : i32
    %c0_i32_0 = arith.constant 0 : i32
    %c0_i32_1 = arith.constant 0 : i32
    return %c0_i32, %c0_i32_0 : i32, i32
  }
  func.func @transform_2(%arg0: i32) -> (i32, i32) {
    %c0_i32 = arith.constant 0 : i32
    %c0_i32_0 = arith.constant 0 : i32
    %c0_i32_1 = arith.constant 0 : i32
    return %c0_i32, %c0_i32_0 : i32, i32
  }
  func.func @transform_3(%arg0: i32) -> (i32, i32) {
    %c0_i32 = arith.constant 0 : i32
    %c0_i32_0 = arith.constant 0 : i32
    return %arg0, %c0_i32 : i32, i32
  }
}

module attributes {stable_mosaic.version = 11 : i64} {
  func.func @_mlp_kernel(%arg0: i32, %arg1: memref<8x400xf32, #tpu.memory_space<vmem>>, %arg2: memref<400x120xf32, #tpu.memory_space<vmem>>, %arg3: memref<1x120xf32, #tpu.memory_space<vmem>>, %arg4: memref<120x84xf32, #tpu.memory_space<vmem>>, %arg5: memref<1x84xf32, #tpu.memory_space<vmem>>, %arg6: memref<84x128xf32, #tpu.memory_space<vmem>>, %arg7: memref<1x128xf32, #tpu.memory_space<vmem>>, %arg8: memref<8x128xf32, #tpu.memory_space<vmem>>) attributes {dimension_semantics = [#tpu.dimension_semantics<parallel>], iteration_bounds = array<i64: 1>, scalar_prefetch = 0 : i64, scratch_operands = 0 : i64, tpu.core_type = #tpu.core_type<tc>, window_params = [{transform_indices = @transform_0, window_bounds = array<i64: 8, 400>}, {pipeline_mode = #tpu.pipeline_mode<synchronous>, transform_indices = @transform_1, window_bounds = array<i64: 400, 120>}, {pipeline_mode = #tpu.pipeline_mode<synchronous>, transform_indices = @transform_2, window_bounds = array<i64: 1, 120>}, {pipeline_mode = #tpu.pipeline_mode<synchronous>, transform_indices = @transform_3, window_bounds = array<i64: 120, 84>}, {pipeline_mode = #tpu.pipeline_mode<synchronous>, transform_indices = @transform_4, window_bounds = array<i64: 1, 84>}, {pipeline_mode = #tpu.pipeline_mode<synchronous>, transform_indices = @transform_5, window_bounds = array<i64: 84, 128>}, {pipeline_mode = #tpu.pipeline_mode<synchronous>, transform_indices = @transform_6, window_bounds = array<i64: 1, 128>}, {transform_indices = @transform_7, window_bounds = array<i64: 8, 128>}]} {
    %c0 = arith.constant 0 : index
    %c0_0 = arith.constant 0 : index
    %0 = vector.load %arg1[%c0, %c0_0] : memref<8x400xf32, #tpu.memory_space<vmem>>, vector<8x400xf32>
    %c0_1 = arith.constant 0 : index
    %c0_2 = arith.constant 0 : index
    %1 = vector.load %arg2[%c0_1, %c0_2] : memref<400x120xf32, #tpu.memory_space<vmem>>, vector<400x120xf32>
    %cst = arith.constant dense<0.000000e+00> : vector<8x120xf32>
    %2 = tpu.matmul %0, %1, %cst {dimension_numbers = #tpu.dot_dimension_numbers<[1], [0], [0], [1], [0, 0, 1, 1], [], []>} : vector<8x400xf32>, vector<400x120xf32>, vector<8x120xf32> -> vector<8x120xf32>
    %c0_3 = arith.constant 0 : index
    %c0_4 = arith.constant 0 : index
    %3 = vector.load %arg3[%c0_3, %c0_4] : memref<1x120xf32, #tpu.memory_space<vmem>>, vector<1x120xf32>
    %4 = vector.broadcast %3 : vector<1x120xf32> to vector<8x120xf32>
    %5 = arith.addf %2, %4 : vector<8x120xf32>
    %cst_5 = arith.constant 0.000000e+00 : f32
    %6 = vector.broadcast %cst_5 : f32 to vector<8x120xf32>
    %7 = arith.maximumf %5, %6 : vector<8x120xf32>
    %c0_6 = arith.constant 0 : index
    %c0_7 = arith.constant 0 : index
    %8 = vector.load %arg4[%c0_6, %c0_7] : memref<120x84xf32, #tpu.memory_space<vmem>>, vector<120x84xf32>
    %cst_8 = arith.constant dense<0.000000e+00> : vector<8x84xf32>
    %9 = tpu.matmul %7, %8, %cst_8 {dimension_numbers = #tpu.dot_dimension_numbers<[1], [0], [0], [1], [0, 0, 1, 1], [], []>} : vector<8x120xf32>, vector<120x84xf32>, vector<8x84xf32> -> vector<8x84xf32>
    %c0_9 = arith.constant 0 : index
    %c0_10 = arith.constant 0 : index
    %10 = vector.load %arg5[%c0_9, %c0_10] : memref<1x84xf32, #tpu.memory_space<vmem>>, vector<1x84xf32>
    %11 = vector.broadcast %10 : vector<1x84xf32> to vector<8x84xf32>
    %12 = arith.addf %9, %11 : vector<8x84xf32>
    %cst_11 = arith.constant 0.000000e+00 : f32
    %13 = vector.broadcast %cst_11 : f32 to vector<8x84xf32>
    %14 = arith.maximumf %12, %13 : vector<8x84xf32>
    %c0_12 = arith.constant 0 : index
    %c0_13 = arith.constant 0 : index
    %15 = vector.load %arg6[%c0_12, %c0_13] : memref<84x128xf32, #tpu.memory_space<vmem>>, vector<84x128xf32>
    %cst_14 = arith.constant dense<0.000000e+00> : vector<8x128xf32>
    %16 = tpu.matmul %14, %15, %cst_14 {dimension_numbers = #tpu.dot_dimension_numbers<[1], [0], [0], [1], [0, 0, 1, 1], [], []>} : vector<8x84xf32>, vector<84x128xf32>, vector<8x128xf32> -> vector<8x128xf32>
    %c0_15 = arith.constant 0 : index
    %c0_16 = arith.constant 0 : index
    %17 = vector.load %arg7[%c0_15, %c0_16] : memref<1x128xf32, #tpu.memory_space<vmem>>, vector<1x128xf32>
    %18 = vector.broadcast %17 : vector<1x128xf32> to vector<8x128xf32>
    %19 = arith.addf %16, %18 : vector<8x128xf32>
    %c0_17 = arith.constant 0 : index
    %c0_18 = arith.constant 0 : index
    %20 = vector.load %arg8[%c0_17, %c0_18] : memref<8x128xf32, #tpu.memory_space<vmem>>, vector<8x128xf32>
    tpu.vector_store %arg8[%c0_17, %c0_18], %19 {strides = array<i32>} : memref<8x128xf32, #tpu.memory_space<vmem>>, vector<8x128xf32>,
    return
  }
  func.func @transform_0(%arg0: i32) -> (i32, i32) {
    %c0_i32 = arith.constant 0 : i32
    %c0_i32_0 = arith.constant 0 : i32
    return %arg0, %c0_i32 : i32, i32
  }
  func.func @transform_1(%arg0: i32) -> (i32, i32) {
    %c0_i32 = arith.constant 0 : i32
    %c0_i32_0 = arith.constant 0 : i32
    %c0_i32_1 = arith.constant 0 : i32
    return %c0_i32, %c0_i32_0 : i32, i32
  }
  func.func @transform_2(%arg0: i32) -> (i32, i32) {
    %c0_i32 = arith.constant 0 : i32
    %c0_i32_0 = arith.constant 0 : i32
    %c0_i32_1 = arith.constant 0 : i32
    return %c0_i32, %c0_i32_0 : i32, i32
  }
  func.func @transform_3(%arg0: i32) -> (i32, i32) {
    %c0_i32 = arith.constant 0 : i32
    %c0_i32_0 = arith.constant 0 : i32
    %c0_i32_1 = arith.constant 0 : i32
    return %c0_i32, %c0_i32_0 : i32, i32
  }
  func.func @transform_4(%arg0: i32) -> (i32, i32) {
    %c0_i32 = arith.constant 0 : i32
    %c0_i32_0 = arith.constant 0 : i32
    %c0_i32_1 = arith.constant 0 : i32
    return %c0_i32, %c0_i32_0 : i32, i32
  }
  func.func @transform_5(%arg0: i32) -> (i32, i32) {
    %c0_i32 = arith.constant 0 : i32
    %c0_i32_0 = arith.constant 0 : i32
    %c0_i32_1 = arith.constant 0 : i32
    return %c0_i32, %c0_i32_0 : i32, i32
  }
  func.func @transform_6(%arg0: i32) -> (i32, i32) {
    %c0_i32 = arith.constant 0 : i32
    %c0_i32_0 = arith.constant 0 : i32
    %c0_i32_1 = arith.constant 0 : i32
    return %c0_i32, %c0_i32_0 : i32, i32
  }
  func.func @transform_7(%arg0: i32) -> (i32, i32) {
    %c0_i32 = arith.constant 0 : i32
    %c0_i32_0 = arith.constant 0 : i32
    return %arg0, %c0_i32 : i32, i32
  }
}

</mosaic_0001>

<llo_original>
// kernel: net_forward.3
$region0: #{net_forward.3}
  #allocation0 [shape = 'u32[]', space=smem, size = 0x4, offset = 0x4, fixed_abs, tag = 'smem constant byte address 0x4 - core index']
  #allocation1 [shape = 'u32[72,128]{1,0:T(1,128)}', space=vmem, size = 0x9000, scoped, tag = 'internal scratch']
  %s0 = inlined_call_operand.vmem [shape: bf16[4,416,75], index: 0, kind: input, shape index: {}]
  %s1 = inlined_call_operand.vmem [shape: bf16[75,6], index: 1, kind: input, shape index: {}]
  %s2 = inlined_call_operand.vmem [shape: f32[1,6], index: 2, kind: input, shape index: {}]
  %s3 = inlined_call_operand.vmem [shape: f32[416,6], index: 3, kind: output, shape index: {}]
  %s4 = sld [smem:[#allocation0]]
  $region86: #{net_forward.3} parent=0
    _
  %s6 = ssub.s32 1, %s4
  %s7 = scalar_select 0, %s6, %s4
  $region1: #{net_forward.3} parent=0
    #allocation2 [shape = 'u8[425984]{0}', space=vmem, size = 0x68000, scoped, tag = 'input window, operand 0']
    loop: start=0, step=1, limit=4
    $region2: #{net_forward.3} parent=1 // loop_pre_header
      _
    $region3: #{net_forward.3} parent=1 // loop_header
      %s9 = sphi 0, %s13
      %p10 = scmp.ge.s32.totalorder %s9, 4
      %s19 = sphi 0, %s21
      %s22 = sphi 0, %s19
      %s23 = sphi 0, %s22
      %s39 = sphi 0, %s23
      %s43 = sphi 0, %s43
      %s45 = sphi 0, %s43
      %s46 = sphi 0, %s45
      %s60 = sphi 0, %s46
      %s64 = sphi 0, %s64
      %s66 = sphi 0, %s64
      %s67 = sphi 0, %s66
      %s81 = sphi 0, %s67
      %s87 = sphi 0, %s89
      %s90 = sphi 0, %s87
      %s91 = sphi 0, %s90
      %s107 = sphi 0, %s91
    $region4: #{net_forward.3} parent=1 // loop_header_branch
      %12 = sbr.rel (%p10) target = $region8
    $region5: #{net_forward.3} parent=1 // loop_body
      %s14 = ssub.s32 %s9, 1
      %s15 = ssub.s32 %s9, 2
      %s16 = sadd.s32 %s9, 1
      %s17 = ssub.s32 %s9, %s16
      %p18 = scmp.eq.s32.totalorder %s17, 0
      %s20 = sadd.s32 %s19, 1
      %s21 = scalar_select %p18, %s19, %s20
      %p24 = pneg %p18
      %p25 = scmp.eq.s32.totalorder %s9, 1
      %p26 = por %p24, %p25
      %p27 = scmp.ne.s32.totalorder %s19, %s22
      %p28 = scmp.eq.s32.totalorder %s9, 0
      %p29 = por %p27, %p28
      %p30 = scmp.ne.s32.totalorder %s19, %s22
      %p31 = scmp.eq.s32.totalorder %s14, 1
      %p32 = por %p30, %p31
      %p33 = scmp.ne.s32.totalorder %s22, %s23
      %p34 = scmp.eq.s32.totalorder %s14, 0
      %p35 = por %p33, %p34
      %p36 = scmp.ne.s32.totalorder %s22, %s23
      %p37 = scmp.eq.s32.totalorder %s15, 1
      %p38 = por %p36, %p37
      %p40 = scmp.ne.s32.totalorder %s23, %s39
      %p41 = scmp.eq.s32.totalorder %s15, 0
      %p42 = por %p40, %p41
      %s44 = sadd.s32 %s43, 1
      %p47 = scmp.eq.s32.totalorder %s9, 1
      %p48 = scmp.ne.s32.totalorder %s43, %s45
      %p49 = scmp.eq.s32.totalorder %s9, 0
      %p50 = por %p48, %p49
      %p51 = scmp.ne.s32.totalorder %s43, %s45
      %p52 = scmp.eq.s32.totalorder %s14, 1
      %p53 = por %p51, %p52
      %p54 = scmp.ne.s32.totalorder %s45, %s46
      %p55 = scmp.eq.s32.totalorder %s14, 0
      %p56 = por %p54, %p55
      %p57 = scmp.ne.s32.totalorder %s45, %s46
      %p58 = scmp.eq.s32.totalorder %s15, 1
      %p59 = por %p57, %p58
      %p61 = scmp.ne.s32.totalorder %s46, %s60
      %p62 = scmp.eq.s32.totalorder %s15, 0
      %p63 = por %p61, %p62
      %s65 = sadd.s32 %s64, 1
      %p68 = scmp.eq.s32.totalorder %s9, 1
      %p69 = scmp.ne.s32.totalorder %s64, %s66
      %p70 = scmp.eq.s32.totalorder %s9, 0
      %p71 = por %p69, %p70
      %p72 = scmp.ne.s32.totalorder %s64, %s66
      %p73 = scmp.eq.s32.totalorder %s14, 1
      %p74 = por %p72, %p73
      %p75 = scmp.ne.s32.totalorder %s66, %s67
      %p76 = scmp.eq.s32.totalorder %s14, 0
      %p77 = por %p75, %p76
      %p78 = scmp.ne.s32.totalorder %s66, %s67
      %p79 = scmp.eq.s32.totalorder %s15, 1
      %p80 = por %p78, %p79
      %p82 = scmp.ne.s32.totalorder %s67, %s81
      %p83 = scmp.eq.s32.totalorder %s15, 0
      %p84 = por %p82, %p83
      %s85 = ssub.s32 %s9, %s16
      %p86 = scmp.eq.s32.totalorder %s85, 0
      %s88 = sadd.s32 %s87, 1
      %s89 = scalar_select %p86, %s87, %s88
      %p92 = pneg %p86
      %p93 = scmp.eq.s32.totalorder %s9, 1
      %p94 = por %p92, %p93
      %p95 = scmp.ne.s32.totalorder %s87, %s90
      %p96 = scmp.eq.s32.totalorder %s9, 0
      %p97 = por %p95, %p96
      %p98 = scmp.ne.s32.totalorder %s87, %s90
      %p99 = scmp.eq.s32.totalorder %s14, 1
      %p100 = por %p98, %p99
      %p101 = scmp.ne.s32.totalorder %s90, %s91
      %p102 = scmp.eq.s32.totalorder %s14, 0
      %p103 = por %p101, %p102
      %p104 = scmp.ne.s32.totalorder %s90, %s91
      %p105 = scmp.eq.s32.totalorder %s15, 1
      %p106 = por %p104, %p105
      %p108 = scmp.ne.s32.totalorder %s91, %s107
      %p109 = scmp.eq.s32.totalorder %s15, 0
      %p110 = por %p108, %p109
      %p111 = scmp.le.s32.totalorder 1, %s9
      %p112 = scmp.lt.s32.totalorder %s9, 3
      %p113 = pnand %p111, %p112
      %p114 = pneg %p113
      // Predicated region
      $region9: #{net_forward.3} parent=5 // pred_check
        _
      $region10: #{net_forward.3} parent=5 // pred_check_branch
        %116 = sbr.rel (%p113) target = $region12
      $region11: #{net_forward.3} parent=5 // pred_region
        %s117 = ssub.s32 %s9, 1
        // Predicated region
        $region13: #{net_forward.3} parent=11 // pred_check
          %p118 = pneg %p56
        $region14: #{net_forward.3} parent=11 // pred_check_branch
          %120 = sbr.rel (%p118) target = $region16
        $region15: #{net_forward.3} parent=11 // pred_region
          _
        $region16: #{net_forward.3} parent=11 // pred_fallthru
          _
        // Predicated region
        $region17: #{net_forward.3} parent=11 // pred_check
          %p121 = pneg %p77
        $region18: #{net_forward.3} parent=11 // pred_check_branch
          %123 = sbr.rel (%p121) target = $region20
        $region19: #{net_forward.3} parent=11 // pred_region
          _
        $region20: #{net_forward.3} parent=11 // pred_fallthru
          _
      $region12: #{net_forward.3} parent=5 // pred_fallthru
        _
      %p124 = scmp.lt.s32.totalorder %s9, 2
      // Predicated region
      $region21: #{net_forward.3} parent=5 // pred_check
        %p125 = pneg %p124
      $region22: #{net_forward.3} parent=5 // pred_check_branch
        %127 = sbr.rel (%p125) target = $region24
      $region23: #{net_forward.3} parent=5 // pred_region
        // Predicated region
        $region25: #{net_forward.3} parent=23 // pred_check
          %p128 = pneg %p29
        $region26: #{net_forward.3} parent=23 // pred_check_branch
          %130 = sbr.rel (%p128) target = $region28
        $region27: #{net_forward.3} parent=23 // pred_region
          %s131 = sand.u32 %s19, 1
          %s132 = sand.u32 %s19, 1
          %s133 = smul.addr %s132, 416
          %s134 = scalar_lea.vmem [#allocation2], %s133
          %s135 = smul.u32 26, %s9
          %s136 = smul.addr %s135, 4
          %s137 = scalar_lea.vmem %s0, %s136
          // Predicated region
          $region29: #{net_forward.3} parent=27 // pred_check
            _
          $region30: #{net_forward.3} parent=27 // pred_check_branch
            %139 = sbr.rel (0) target = $region32
          $region31: #{net_forward.3} parent=27 // pred_region
            // Predicated region
            $region33: #{net_forward.3} parent=31 // pred_check
              _
            $region34: #{net_forward.3} parent=31 // pred_check_branch
              %141 = sbr.rel target = $region36
            $region35: #{net_forward.3} parent=31 // pred_region
              // Predicated region
              $region48: #{net_forward.3} parent=35 // pred_check
                _
              $region49: #{net_forward.3} parent=35 // pred_check_branch
                %363 = sbr.rel (0) target = $region51
              $region50: #{net_forward.3} parent=35 // pred_region
                loop: start=0, step=1, limit=1
                $region52: #{net_forward.3} parent=50 // loop_pre_header
                  _
                $region53: #{net_forward.3} parent=50 // loop_header
                  %s365 = sphi 0, %s369
                  %p366 = scmp.ge.s32.totalorder %s365, 1
                  %s370 = sphi %s137, %s137
                  %s371 = sphi %s134, %s134
                $region54: #{net_forward.3} parent=50 // loop_header_branch
                  %368 = sbr.rel (%p366) target = $region58
                $region55: #{net_forward.3} parent=50 // loop_body
                  _
                $region56: #{net_forward.3} parent=50 // loop_footer
                  %s369 = sadd.s32 1, %s365
                $region57: #{net_forward.3} parent=50 // loop_footer_branch
                  %364 = sbr.rel target = $region53
                $region58: #{net_forward.3} parent=50 // loop_exit
                  _
                %s373 = ssub.s32 16, 1
                loop: start=0, step=1, limit=1
                $region59: #{net_forward.3} parent=50 // loop_pre_header
                  _
                $region60: #{net_forward.3} parent=50 // loop_header
                  %s375 = sphi 0, %s379
                  %p376 = scmp.ge.s32.totalorder %s375, 1
                  %s380 = sphi %s137, %s137
                  %s381 = sphi %s134, %s134
                $region61: #{net_forward.3} parent=50 // loop_header_branch
                  %378 = sbr.rel (%p376) target = $region65
                $region62: #{net_forward.3} parent=50 // loop_body
                  %v382 = vld [vmem:[%s380] sm:%s373]
                  %383 = vst [vmem:[%s381] sm:%s373] %v382
                  %v384 = vld [vmem:[%s380 + $0x4] sm:%s373]
                  %385 = vst [vmem:[%s381 + $0x4] sm:%s373] %v384
                  %v386 = vld [vmem:[%s380 + $0x8] sm:%s373]
                  %387 = vst [vmem:[%s381 + $0x8] sm:%s373] %v386
                  %v388 = vld [vmem:[%s380 + $0xc] sm:%s373]
                  %389 = vst [vmem:[%s381 + $0xc] sm:%s373] %v388
                  %v390 = vld [vmem:[%s380 + $0x10] sm:%s373]
                  %391 = vst [vmem:[%s381 + $0x10] sm:%s373] %v390
                  %v392 = vld [vmem:[%s380 + $0x14] sm:%s373]
                  %393 = vst [vmem:[%s381 + $0x14] sm:%s373] %v392
                  %v394 = vld [vmem:[%s380 + $0x18] sm:%s373]
                  %395 = vst [vmem:[%s381 + $0x18] sm:%s373] %v394
                  %v396 = vld [vmem:[%s380 + $0x1c] sm:%s373]
                  %397 = vst [vmem:[%s381 + $0x1c] sm:%s373] %v396
                  %v398 = vld [vmem:[%s380 + $0x20] sm:%s373]
                  %399 = vst [vmem:[%s381 + $0x20] sm:%s373] %v398
                  %v400 = vld [vmem:[%s380 + $0x24] sm:%s373]
                  %401 = vst [vmem:[%s381 + $0x24] sm:%s373] %v400
                  %v402 = vld [vmem:[%s380 + $0x28] sm:%s373]
                  %403 = vst [vmem:[%s381 + $0x28] sm:%s373] %v402
                  %v404 = vld [vmem:[%s380 + $0x2c] sm:%s373]
                  %405 = vst [vmem:[%s381 + $0x2c] sm:%s373] %v404
                  %v406 = vld [vmem:[%s380 + $0x30] sm:%s373]
                  %407 = vst [vmem:[%s381 + $0x30] sm:%s373] %v406
                  %v408 = vld [vmem:[%s380 + $0x34] sm:%s373]
                  %409 = vst [vmem:[%s381 + $0x34] sm:%s373] %v408
                  %v410 = vld [vmem:[%s380 + $0x38] sm:%s373]
                  %411 = vst [vmem:[%s381 + $0x38] sm:%s373] %v410
                  %v412 = vld [vmem:[%s380 + $0x3c] sm:%s373]
                  %413 = vst [vmem:[%s381 + $0x3c] sm:%s373] %v412
                  %v414 = vld [vmem:[%s380 + $0x40] sm:%s373]
                  %415 = vst [vmem:[%s381 + $0x40] sm:%s373] %v414
                  %v416 = vld [vmem:[%s380 + $0x44] sm:%s373]
                  %417 = vst [vmem:[%s381 + $0x44] sm:%s373] %v416
                  %v418 = vld [vmem:[%s380 + $0x48] sm:%s373]
                  %419 = vst [vmem:[%s381 + $0x48] sm:%s373] %v418
                  %v420 = vld [vmem:[%s380 + $0x4c] sm:%s373]
                  %421 = vst [vmem:[%s381 + $0x4c] sm:%s373] %v420
                  %v422 = vld [vmem:[%s380 + $0x50] sm:%s373]
                  %423 = vst [vmem:[%s381 + $0x50] sm:%s373] %v422
                  %v424 = vld [vmem:[%s380 + $0x54] sm:%s373]
                  %425 = vst [vmem:[%s381 + $0x54] sm:%s373] %v424
                  %v426 = vld [vmem:[%s380 + $0x58] sm:%s373]
                  %427 = vst [vmem:[%s381 + $0x58] sm:%s373] %v426
                  %v428 = vld [vmem:[%s380 + $0x5c] sm:%s373]
                  %429 = vst [vmem:[%s381 + $0x5c] sm:%s373] %v428
                  %v430 = vld [vmem:[%s380 + $0x60] sm:%s373]
                  %431 = vst [vmem:[%s381 + $0x60] sm:%s373] %v430
                  %v432 = vld [vmem:[%s380 + $0x64] sm:%s373]
                  %433 = vst [vmem:[%s381 + $0x64] sm:%s373] %v432
                  %v434 = vld [vmem:[%s380 + $0xd0] sm:%s373]
                  %435 = vst [vmem:[%s381 + $0x68] sm:%s373] %v434
                  %v436 = vld [vmem:[%s380 + $0xd4] sm:%s373]
                  %437 = vst [vmem:[%s381 + $0x6c] sm:%s373] %v436
                  %v438 = vld [vmem:[%s380 + $0xd8] sm:%s373]
                  %439 = vst [vmem:[%s381 + $0x70] sm:%s373] %v438
                  %v440 = vld [vmem:[%s380 + $0xdc] sm:%s373]
                  %441 = vst [vmem:[%s381 + $0x74] sm:%s373] %v440
                  %v442 = vld [vmem:[%s380 + $0xe0] sm:%s373]
                  %443 = vst [vmem:[%s381 + $0x78] sm:%s373] %v442
                  %v444 = vld [vmem:[%s380 + $0xe4] sm:%s373]
                  %445 = vst [vmem:[%s381 + $0x7c] sm:%s373] %v444
                  %v446 = vld [vmem:[%s380 + $0xe8] sm:%s373]
                  %447 = vst [vmem:[%s381 + $0x80] sm:%s373] %v446
                  %v448 = vld [vmem:[%s380 + $0xec] sm:%s373]
                  %449 = vst [vmem:[%s381 + $0x84] sm:%s373] %v448
                  %v450 = vld [vmem:[%s380 + $0xf0] sm:%s373]
                  %451 = vst [vmem:[%s381 + $0x88] sm:%s373] %v450
                  %v452 = vld [vmem:[%s380 + $0xf4] sm:%s373]
                  %453 = vst [vmem:[%s381 + $0x8c] sm:%s373] %v452
                  %v454 = vld [vmem:[%s380 + $0xf8] sm:%s373]
                  %455 = vst [vmem:[%s381 + $0x90] sm:%s373] %v454
                  %v456 = vld [vmem:[%s380 + $0xfc] sm:%s373]
                  %457 = vst [vmem:[%s381 + $0x94] sm:%s373] %v456
                  %v458 = vld [vmem:[%s380 + $0x100] sm:%s373]
                  %459 = vst [vmem:[%s381 + $0x98] sm:%s373] %v458
                  %v460 = vld [vmem:[%s380 + $0x104] sm:%s373]
                  %461 = vst [vmem:[%s381 + $0x9c] sm:%s373] %v460
                  %v462 = vld [vmem:[%s380 + $0x108] sm:%s373]
                  %463 = vst [vmem:[%s381 + $0xa0] sm:%s373] %v462
                  %v464 = vld [vmem:[%s380 + $0x10c] sm:%s373]
                  %465 = vst [vmem:[%s381 + $0xa4] sm:%s373] %v464
                  %v466 = vld [vmem:[%s380 + $0x110] sm:%s373]
                  %467 = vst [vmem:[%s381 + $0xa8] sm:%s373] %v466
                  %v468 = vld [vmem:[%s380 + $0x114] sm:%s373]
                  %469 = vst [vmem:[%s381 + $0xac] sm:%s373] %v468
                  %v470 = vld [vmem:[%s380 + $0x118] sm:%s373]
                  %471 = vst [vmem:[%s381 + $0xb0] sm:%s373] %v470
                  %v472 = vld [vmem:[%s380 + $0x11c] sm:%s373]
                  %473 = vst [vmem:[%s381 + $0xb4] sm:%s373] %v472
                  %v474 = vld [vmem:[%s380 + $0x120] sm:%s373]
                  %475 = vst [vmem:[%s381 + $0xb8] sm:%s373] %v474
                  %v476 = vld [vmem:[%s380 + $0x124] sm:%s373]
                  %477 = vst [vmem:[%s381 + $0xbc] sm:%s373] %v476
                  %v478 = vld [vmem:[%s380 + $0x128] sm:%s373]
                  %479 = vst [vmem:[%s381 + $0xc0] sm:%s373] %v478
                  %v480 = vld [vmem:[%s380 + $0x12c] sm:%s373]
                  %481 = vst [vmem:[%s381 + $0xc4] sm:%s373] %v480
                  %v482 = vld [vmem:[%s380 + $0x130] sm:%s373]
                  %483 = vst [vmem:[%s381 + $0xc8] sm:%s373] %v482
                  %v484 = vld [vmem:[%s380 + $0x134] sm:%s373]
                  %485 = vst [vmem:[%s381 + $0xcc] sm:%s373] %v484
                  %v486 = vld [vmem:[%s380 + $0x1a0] sm:%s373]
                  %487 = vst [vmem:[%s381 + $0xd0] sm:%s373] %v486
                  %v488 = vld [vmem:[%s380 + $0x1a4] sm:%s373]
                  %489 = vst [vmem:[%s381 + $0xd4] sm:%s373] %v488
                  %v490 = vld [vmem:[%s380 + $0x1a8] sm:%s373]
                  %491 = vst [vmem:[%s381 + $0xd8] sm:%s373] %v490
                  %v492 = vld [vmem:[%s380 + $0x1ac] sm:%s373]
                  %493 = vst [vmem:[%s381 + $0xdc] sm:%s373] %v492
                  %v494 = vld [vmem:[%s380 + $0x1b0] sm:%s373]
                  %495 = vst [vmem:[%s381 + $0xe0] sm:%s373] %v494
                  %v496 = vld [vmem:[%s380 + $0x1b4] sm:%s373]
                  %497 = vst [vmem:[%s381 + $0xe4] sm:%s373] %v496
                  %v498 = vld [vmem:[%s380 + $0x1b8] sm:%s373]
                  %499 = vst [vmem:[%s381 + $0xe8] sm:%s373] %v498
                  %v500 = vld [vmem:[%s380 + $0x1bc] sm:%s373]
                  %501 = vst [vmem:[%s381 + $0xec] sm:%s373] %v500
                  %v502 = vld [vmem:[%s380 + $0x1c0] sm:%s373]
                  %503 = vst [vmem:[%s381 + $0xf0] sm:%s373] %v502
                  %v504 = vld [vmem:[%s380 + $0x1c4] sm:%s373]
                  %505 = vst [vmem:[%s381 + $0xf4] sm:%s373] %v504
                  %v506 = vld [vmem:[%s380 + $0x1c8] sm:%s373]
                  %507 = vst [vmem:[%s381 + $0xf8] sm:%s373] %v506
                  %v508 = vld [vmem:[%s380 + $0x1cc] sm:%s373]
                  %509 = vst [vmem:[%s381 + $0xfc] sm:%s373] %v508
                  %v510 = vld [vmem:[%s380 + $0x1d0] sm:%s373]
                  %511 = vst [vmem:[%s381 + $0x100] sm:%s373] %v510
                  %v512 = vld [vmem:[%s380 + $0x1d4] sm:%s373]
                  %513 = vst [vmem:[%s381 + $0x104] sm:%s373] %v512
                  %v514 = vld [vmem:[%s380 + $0x1d8] sm:%s373]
                  %515 = vst [vmem:[%s381 + $0x108] sm:%s373] %v514
                  %v516 = vld [vmem:[%s380 + $0x1dc] sm:%s373]
                  %517 = vst [vmem:[%s381 + $0x10c] sm:%s373] %v516
                  %v518 = vld [vmem:[%s380 + $0x1e0] sm:%s373]
                  %519 = vst [vmem:[%s381 + $0x110] sm:%s373] %v518
                  %v520 = vld [vmem:[%s380 + $0x1e4] sm:%s373]
                  %521 = vst [vmem:[%s381 + $0x114] sm:%s373] %v520
                  %v522 = vld [vmem:[%s380 + $0x1e8] sm:%s373]
                  %523 = vst [vmem:[%s381 + $0x118] sm:%s373] %v522
                  %v524 = vld [vmem:[%s380 + $0x1ec] sm:%s373]
                  %525 = vst [vmem:[%s381 + $0x11c] sm:%s373] %v524
                  %v526 = vld [vmem:[%s380 + $0x1f0] sm:%s373]
                  %527 = vst [vmem:[%s381 + $0x120] sm:%s373] %v526
                  %v528 = vld [vmem:[%s380 + $0x1f4] sm:%s373]
                  %529 = vst [vmem:[%s381 + $0x124] sm:%s373] %v528
                  %v530 = vld [vmem:[%s380 + $0x1f8] sm:%s373]
                  %531 = vst [vmem:[%s381 + $0x128] sm:%s373] %v530
                  %v532 = vld [vmem:[%s380 + $0x1fc] sm:%s373]
                  %533 = vst [vmem:[%s381 + $0x12c] sm:%s373] %v532
                  %v534 = vld [vmem:[%s380 + $0x200] sm:%s373]
                  %535 = vst [vmem:[%s381 + $0x130] sm:%s373] %v534
                  %v536 = vld [vmem:[%s380 + $0x204] sm:%s373]
                  %537 = vst [vmem:[%s381 + $0x134] sm:%s373] %v536
                  %v538 = vld [vmem:[%s380 + $0x270] sm:%s373]
                  %539 = vst [vmem:[%s381 + $0x138] sm:%s373] %v538
                  %v540 = vld [vmem:[%s380 + $0x274] sm:%s373]
                  %541 = vst [vmem:[%s381 + $0x13c] sm:%s373] %v540
                  %v542 = vld [vmem:[%s380 + $0x278] sm:%s373]
                  %543 = vst [vmem:[%s381 + $0x140] sm:%s373] %v542
                  %v544 = vld [vmem:[%s380 + $0x27c] sm:%s373]
                  %545 = vst [vmem:[%s381 + $0x144] sm:%s373] %v544
                  %v546 = vld [vmem:[%s380 + $0x280] sm:%s373]
                  %547 = vst [vmem:[%s381 + $0x148] sm:%s373] %v546
                  %v548 = vld [vmem:[%s380 + $0x284] sm:%s373]
                  %549 = vst [vmem:[%s381 + $0x14c] sm:%s373] %v548
                  %v550 = vld [vmem:[%s380 + $0x288] sm:%s373]
                  %551 = vst [vmem:[%s381 + $0x150] sm:%s373] %v550
                  %v552 = vld [vmem:[%s380 + $0x28c] sm:%s373]
                  %553 = vst [vmem:[%s381 + $0x154] sm:%s373] %v552
                  %v554 = vld [vmem:[%s380 + $0x290] sm:%s373]
                  %555 = vst [vmem:[%s381 + $0x158] sm:%s373] %v554
                  %v556 = vld [vmem:[%s380 + $0x294] sm:%s373]
                  %557 = vst [vmem:[%s381 + $0x15c] sm:%s373] %v556
                  %v558 = vld [vmem:[%s380 + $0x298] sm:%s373]
                  %559 = vst [vmem:[%s381 + $0x160] sm:%s373] %v558
                  %v560 = vld [vmem:[%s380 + $0x29c] sm:%s373]
                  %561 = vst [vmem:[%s381 + $0x164] sm:%s373] %v560
                  %v562 = vld [vmem:[%s380 + $0x2a0] sm:%s373]
                  %563 = vst [vmem:[%s381 + $0x168] sm:%s373] %v562
                  %v564 = vld [vmem:[%s380 + $0x2a4] sm:%s373]
                  %565 = vst [vmem:[%s381 + $0x16c] sm:%s373] %v564
                  %v566 = vld [vmem:[%s380 + $0x2a8] sm:%s373]
                  %567 = vst [vmem:[%s381 + $0x170] sm:%s373] %v566
                  %v568 = vld [vmem:[%s380 + $0x2ac] sm:%s373]
                  %569 = vst [vmem:[%s381 + $0x174] sm:%s373] %v568
                  %v570 = vld [vmem:[%s380 + $0x2b0] sm:%s373]
                  %571 = vst [vmem:[%s381 + $0x178] sm:%s373] %v570
                  %v572 = vld [vmem:[%s380 + $0x2b4] sm:%s373]
                  %573 = vst [vmem:[%s381 + $0x17c] sm:%s373] %v572
                  %v574 = vld [vmem:[%s380 + $0x2b8] sm:%s373]
                  %575 = vst [vmem:[%s381 + $0x180] sm:%s373] %v574
                  %v576 = vld [vmem:[%s380 + $0x2bc] sm:%s373]
                  %577 = vst [vmem:[%s381 + $0x184] sm:%s373] %v576
                  %v578 = vld [vmem:[%s380 + $0x2c0] sm:%s373]
                  %579 = vst [vmem:[%s381 + $0x188] sm:%s373] %v578
                  %v580 = vld [vmem:[%s380 + $0x2c4] sm:%s373]
                  %581 = vst [vmem:[%s381 + $0x18c] sm:%s373] %v580
                  %v582 = vld [vmem:[%s380 + $0x2c8] sm:%s373]
                  %583 = vst [vmem:[%s381 + $0x190] sm:%s373] %v582
                  %v584 = vld [vmem:[%s380 + $0x2cc] sm:%s373]
                  %585 = vst [vmem:[%s381 + $0x194] sm:%s373] %v584
                  %v586 = vld [vmem:[%s380 + $0x2d0] sm:%s373]
                  %587 = vst [vmem:[%s381 + $0x198] sm:%s373] %v586
                  %v588 = vld [vmem:[%s380 + $0x2d4] sm:%s373]
                  %589 = vst [vmem:[%s381 + $0x19c] sm:%s373] %v588
                $region63: #{net_forward.3} parent=50 // loop_footer
                  %s379 = sadd.s32 1, %s375
                $region64: #{net_forward.3} parent=50 // loop_footer_branch
                  %374 = sbr.rel target = $region60
                $region65: #{net_forward.3} parent=50 // loop_exit
                  _
              $region51: #{net_forward.3} parent=35 // pred_fallthru
                _
            $region36: #{net_forward.3} parent=31 // pred_fallthru
              _
            // Predicated region
            $region37: #{net_forward.3} parent=31 // pred_check
              _
            $region38: #{net_forward.3} parent=31 // pred_check_branch
              %143 = sbr.rel (0) target = $region40
            $region39: #{net_forward.3} parent=31 // pred_region
              %s145 = ssub.s32 16, 1
              loop: start=0, step=1, limit=1
              $region41: #{net_forward.3} parent=39 // loop_pre_header
                _
              $region42: #{net_forward.3} parent=39 // loop_header
                %s147 = sphi 0, %s151
                %p148 = scmp.ge.s32.totalorder %s147, 1
                %s152 = sphi %s137, %s137
                %s153 = sphi %s134, %s134
              $region43: #{net_forward.3} parent=39 // loop_header_branch
                %150 = sbr.rel (%p148) target = $region47
              $region44: #{net_forward.3} parent=39 // loop_body
                %v154 = vld [vmem:[%s152] sm:%s145]
                %155 = vst [vmem:[%s153] sm:%s145] %v154
                %v156 = vld [vmem:[%s152 + $0x4] sm:%s145]
                %157 = vst [vmem:[%s153 + $0x4] sm:%s145] %v156
                %v158 = vld [vmem:[%s152 + $0x8] sm:%s145]
                %159 = vst [vmem:[%s153 + $0x8] sm:%s145] %v158
                %v160 = vld [vmem:[%s152 + $0xc] sm:%s145]
                %161 = vst [vmem:[%s153 + $0xc] sm:%s145] %v160
                %v162 = vld [vmem:[%s152 + $0x10] sm:%s145]
                %163 = vst [vmem:[%s153 + $0x10] sm:%s145] %v162
                %v164 = vld [vmem:[%s152 + $0x14] sm:%s145]
                %165 = vst [vmem:[%s153 + $0x14] sm:%s145] %v164
                %v166 = vld [vmem:[%s152 + $0x18] sm:%s145]
                %167 = vst [vmem:[%s153 + $0x18] sm:%s145] %v166
                %v168 = vld [vmem:[%s152 + $0x1c] sm:%s145]
                %169 = vst [vmem:[%s153 + $0x1c] sm:%s145] %v168
                %v170 = vld [vmem:[%s152 + $0x20] sm:%s145]
                %171 = vst [vmem:[%s153 + $0x20] sm:%s145] %v170
                %v172 = vld [vmem:[%s152 + $0x24] sm:%s145]
                %173 = vst [vmem:[%s153 + $0x24] sm:%s145] %v172
                %v174 = vld [vmem:[%s152 + $0x28] sm:%s145]
                %175 = vst [vmem:[%s153 + $0x28] sm:%s145] %v174
                %v176 = vld [vmem:[%s152 + $0x2c] sm:%s145]
                %177 = vst [vmem:[%s153 + $0x2c] sm:%s145] %v176
                %v178 = vld [vmem:[%s152 + $0x30] sm:%s145]
                %179 = vst [vmem:[%s153 + $0x30] sm:%s145] %v178
                %v180 = vld [vmem:[%s152 + $0x34] sm:%s145]
                %181 = vst [vmem:[%s153 + $0x34] sm:%s145] %v180
                %v182 = vld [vmem:[%s152 + $0x38] sm:%s145]
                %183 = vst [vmem:[%s153 + $0x38] sm:%s145] %v182
                %v184 = vld [vmem:[%s152 + $0x3c] sm:%s145]
                %185 = vst [vmem:[%s153 + $0x3c] sm:%s145] %v184
                %v186 = vld [vmem:[%s152 + $0x40] sm:%s145]
                %187 = vst [vmem:[%s153 + $0x40] sm:%s145] %v186
                %v188 = vld [vmem:[%s152 + $0x44] sm:%s145]
                %189 = vst [vmem:[%s153 + $0x44] sm:%s145] %v188
                %v190 = vld [vmem:[%s152 + $0x48] sm:%s145]
                %191 = vst [vmem:[%s153 + $0x48] sm:%s145] %v190
                %v192 = vld [vmem:[%s152 + $0x4c] sm:%s145]
                %193 = vst [vmem:[%s153 + $0x4c] sm:%s145] %v192
                %v194 = vld [vmem:[%s152 + $0x50] sm:%s145]
                %195 = vst [vmem:[%s153 + $0x50] sm:%s145] %v194
                %v196 = vld [vmem:[%s152 + $0x54] sm:%s145]
                %197 = vst [vmem:[%s153 + $0x54] sm:%s145] %v196
                %v198 = vld [vmem:[%s152 + $0x58] sm:%s145]
                %199 = vst [vmem:[%s153 + $0x58] sm:%s145] %v198
                %v200 = vld [vmem:[%s152 + $0x5c] sm:%s145]
                %201 = vst [vmem:[%s153 + $0x5c] sm:%s145] %v200
                %v202 = vld [vmem:[%s152 + $0x60] sm:%s145]
                %203 = vst [vmem:[%s153 + $0x60] sm:%s145] %v202
                %v204 = vld [vmem:[%s152 + $0x64] sm:%s145]
                %205 = vst [vmem:[%s153 + $0x64] sm:%s145] %v204
                %v206 = vld [vmem:[%s152 + $0xd0] sm:%s145]
                %207 = vst [vmem:[%s153 + $0x68] sm:%s145] %v206
                %v208 = vld [vmem:[%s152 + $0xd4] sm:%s145]
                %209 = vst [vmem:[%s153 + $0x6c] sm:%s145] %v208
                %v210 = vld [vmem:[%s152 + $0xd8] sm:%s145]
                %211 = vst [vmem:[%s153 + $0x70] sm:%s145] %v210
                %v212 = vld [vmem:[%s152 + $0xdc] sm:%s145]
                %213 = vst [vmem:[%s153 + $0x74] sm:%s145] %v212
                %v214 = vld [vmem:[%s152 + $0xe0] sm:%s145]
                %215 = vst [vmem:[%s153 + $0x78] sm:%s145] %v214
                %v216 = vld [vmem:[%s152 + $0xe4] sm:%s145]
                %217 = vst [vmem:[%s153 + $0x7c] sm:%s145] %v216
                %v218 = vld [vmem:[%s152 + $0xe8] sm:%s145]
                %219 = vst [vmem:[%s153 + $0x80] sm:%s145] %v218
                %v220 = vld [vmem:[%s152 + $0xec] sm:%s145]
                %221 = vst [vmem:[%s153 + $0x84] sm:%s145] %v220
                %v222 = vld [vmem:[%s152 + $0xf0] sm:%s145]
                %223 = vst [vmem:[%s153 + $0x88] sm:%s145] %v222
                %v224 = vld [vmem:[%s152 + $0xf4] sm:%s145]
                %225 = vst [vmem:[%s153 + $0x8c] sm:%s145] %v224
                %v226 = vld [vmem:[%s152 + $0xf8] sm:%s145]
                %227 = vst [vmem:[%s153 + $0x90] sm:%s145] %v226
                %v228 = vld [vmem:[%s152 + $0xfc] sm:%s145]
                %229 = vst [vmem:[%s153 + $0x94] sm:%s145] %v228
                %v230 = vld [vmem:[%s152 + $0x100] sm:%s145]
                %231 = vst [vmem:[%s153 + $0x98] sm:%s145] %v230
                %v232 = vld [vmem:[%s152 + $0x104] sm:%s145]
                %233 = vst [vmem:[%s153 + $0x9c] sm:%s145] %v232
                %v234 = vld [vmem:[%s152 + $0x108] sm:%s145]
                %235 = vst [vmem:[%s153 + $0xa0] sm:%s145] %v234
                %v236 = vld [vmem:[%s152 + $0x10c] sm:%s145]
                %237 = vst [vmem:[%s153 + $0xa4] sm:%s145] %v236
                %v238 = vld [vmem:[%s152 + $0x110] sm:%s145]
                %239 = vst [vmem:[%s153 + $0xa8] sm:%s145] %v238
                %v240 = vld [vmem:[%s152 + $0x114] sm:%s145]
                %241 = vst [vmem:[%s153 + $0xac] sm:%s145] %v240
                %v242 = vld [vmem:[%s152 + $0x118] sm:%s145]
                %243 = vst [vmem:[%s153 + $0xb0] sm:%s145] %v242
                %v244 = vld [vmem:[%s152 + $0x11c] sm:%s145]
                %245 = vst [vmem:[%s153 + $0xb4] sm:%s145] %v244
                %v246 = vld [vmem:[%s152 + $0x120] sm:%s145]
                %247 = vst [vmem:[%s153 + $0xb8] sm:%s145] %v246
                %v248 = vld [vmem:[%s152 + $0x124] sm:%s145]
                %249 = vst [vmem:[%s153 + $0xbc] sm:%s145] %v248
                %v250 = vld [vmem:[%s152 + $0x128] sm:%s145]
                %251 = vst [vmem:[%s153 + $0xc0] sm:%s145] %v250
                %v252 = vld [vmem:[%s152 + $0x12c] sm:%s145]
                %253 = vst [vmem:[%s153 + $0xc4] sm:%s145] %v252
                %v254 = vld [vmem:[%s152 + $0x130] sm:%s145]
                %255 = vst [vmem:[%s153 + $0xc8] sm:%s145] %v254
                %v256 = vld [vmem:[%s152 + $0x134] sm:%s145]
                %257 = vst [vmem:[%s153 + $0xcc] sm:%s145] %v256
                %v258 = vld [vmem:[%s152 + $0x1a0] sm:%s145]
                %259 = vst [vmem:[%s153 + $0xd0] sm:%s145] %v258
                %v260 = vld [vmem:[%s152 + $0x1a4] sm:%s145]
                %261 = vst [vmem:[%s153 + $0xd4] sm:%s145] %v260
                %v262 = vld [vmem:[%s152 + $0x1a8] sm:%s145]
                %263 = vst [vmem:[%s153 + $0xd8] sm:%s145] %v262
                %v264 = vld [vmem:[%s152 + $0x1ac] sm:%s145]
                %265 = vst [vmem:[%s153 + $0xdc] sm:%s145] %v264
                %v266 = vld [vmem:[%s152 + $0x1b0] sm:%s145]
                %267 = vst [vmem:[%s153 + $0xe0] sm:%s145] %v266
                %v268 = vld [vmem:[%s152 + $0x1b4] sm:%s145]
                %269 = vst [vmem:[%s153 + $0xe4] sm:%s145] %v268
                %v270 = vld [vmem:[%s152 + $0x1b8] sm:%s145]
                %271 = vst [vmem:[%s153 + $0xe8] sm:%s145] %v270
                %v272 = vld [vmem:[%s152 + $0x1bc] sm:%s145]
                %273 = vst [vmem:[%s153 + $0xec] sm:%s145] %v272
                %v274 = vld [vmem:[%s152 + $0x1c0] sm:%s145]
                %275 = vst [vmem:[%s153 + $0xf0] sm:%s145] %v274
                %v276 = vld [vmem:[%s152 + $0x1c4] sm:%s145]
                %277 = vst [vmem:[%s153 + $0xf4] sm:%s145] %v276
                %v278 = vld [vmem:[%s152 + $0x1c8] sm:%s145]
                %279 = vst [vmem:[%s153 + $0xf8] sm:%s145] %v278
                %v280 = vld [vmem:[%s152 + $0x1cc] sm:%s145]
                %281 = vst [vmem:[%s153 + $0xfc] sm:%s145] %v280
                %v282 = vld [vmem:[%s152 + $0x1d0] sm:%s145]
                %283 = vst [vmem:[%s153 + $0x100] sm:%s145] %v282
                %v284 = vld [vmem:[%s152 + $0x1d4] sm:%s145]
                %285 = vst [vmem:[%s153 + $0x104] sm:%s145] %v284
                %v286 = vld [vmem:[%s152 + $0x1d8] sm:%s145]
                %287 = vst [vmem:[%s153 + $0x108] sm:%s145] %v286
                %v288 = vld [vmem:[%s152 + $0x1dc] sm:%s145]
                %289 = vst [vmem:[%s153 + $0x10c] sm:%s145] %v288
                %v290 = vld [vmem:[%s152 + $0x1e0] sm:%s145]
                %291 = vst [vmem:[%s153 + $0x110] sm:%s145] %v290
                %v292 = vld [vmem:[%s152 + $0x1e4] sm:%s145]
                %293 = vst [vmem:[%s153 + $0x114] sm:%s145] %v292
                %v294 = vld [vmem:[%s152 + $0x1e8] sm:%s145]
                %295 = vst [vmem:[%s153 + $0x118] sm:%s145] %v294
                %v296 = vld [vmem:[%s152 + $0x1ec] sm:%s145]
                %297 = vst [vmem:[%s153 + $0x11c] sm:%s145] %v296
                %v298 = vld [vmem:[%s152 + $0x1f0] sm:%s145]
                %299 = vst [vmem:[%s153 + $0x120] sm:%s145] %v298
                %v300 = vld [vmem:[%s152 + $0x1f4] sm:%s145]
                %301 = vst [vmem:[%s153 + $0x124] sm:%s145] %v300
                %v302 = vld [vmem:[%s152 + $0x1f8] sm:%s145]
                %303 = vst [vmem:[%s153 + $0x128] sm:%s145] %v302
                %v304 = vld [vmem:[%s152 + $0x1fc] sm:%s145]
                %305 = vst [vmem:[%s153 + $0x12c] sm:%s145] %v304
                %v306 = vld [vmem:[%s152 + $0x200] sm:%s145]
                %307 = vst [vmem:[%s153 + $0x130] sm:%s145] %v306
                %v308 = vld [vmem:[%s152 + $0x204] sm:%s145]
                %309 = vst [vmem:[%s153 + $0x134] sm:%s145] %v308
                %v310 = vld [vmem:[%s152 + $0x270] sm:%s145]
                %311 = vst [vmem:[%s153 + $0x138] sm:%s145] %v310
                %v312 = vld [vmem:[%s152 + $0x274] sm:%s145]
                %313 = vst [vmem:[%s153 + $0x13c] sm:%s145] %v312
                %v314 = vld [vmem:[%s152 + $0x278] sm:%s145]
                %315 = vst [vmem:[%s153 + $0x140] sm:%s145] %v314
                %v316 = vld [vmem:[%s152 + $0x27c] sm:%s145]
                %317 = vst [vmem:[%s153 + $0x144] sm:%s145] %v316
                %v318 = vld [vmem:[%s152 + $0x280] sm:%s145]
                %319 = vst [vmem:[%s153 + $0x148] sm:%s145] %v318
                %v320 = vld [vmem:[%s152 + $0x284] sm:%s145]
                %321 = vst [vmem:[%s153 + $0x14c] sm:%s145] %v320
                %v322 = vld [vmem:[%s152 + $0x288] sm:%s145]
                %323 = vst [vmem:[%s153 + $0x150] sm:%s145] %v322
                %v324 = vld [vmem:[%s152 + $0x28c] sm:%s145]
                %325 = vst [vmem:[%s153 + $0x154] sm:%s145] %v324
                %v326 = vld [vmem:[%s152 + $0x290] sm:%s145]
                %327 = vst [vmem:[%s153 + $0x158] sm:%s145] %v326
                %v328 = vld [vmem:[%s152 + $0x294] sm:%s145]
                %329 = vst [vmem:[%s153 + $0x15c] sm:%s145] %v328
                %v330 = vld [vmem:[%s152 + $0x298] sm:%s145]
                %331 = vst [vmem:[%s153 + $0x160] sm:%s145] %v330
                %v332 = vld [vmem:[%s152 + $0x29c] sm:%s145]
                %333 = vst [vmem:[%s153 + $0x164] sm:%s145] %v332
                %v334 = vld [vmem:[%s152 + $0x2a0] sm:%s145]
                %335 = vst [vmem:[%s153 + $0x168] sm:%s145] %v334
                %v336 = vld [vmem:[%s152 + $0x2a4] sm:%s145]
                %337 = vst [vmem:[%s153 + $0x16c] sm:%s145] %v336
                %v338 = vld [vmem:[%s152 + $0x2a8] sm:%s145]
                %339 = vst [vmem:[%s153 + $0x170] sm:%s145] %v338
                %v340 = vld [vmem:[%s152 + $0x2ac] sm:%s145]
                %341 = vst [vmem:[%s153 + $0x174] sm:%s145] %v340
                %v342 = vld [vmem:[%s152 + $0x2b0] sm:%s145]
                %343 = vst [vmem:[%s153 + $0x178] sm:%s145] %v342
                %v344 = vld [vmem:[%s152 + $0x2b4] sm:%s145]
                %345 = vst [vmem:[%s153 + $0x17c] sm:%s145] %v344
                %v346 = vld [vmem:[%s152 + $0x2b8] sm:%s145]
                %347 = vst [vmem:[%s153 + $0x180] sm:%s145] %v346
                %v348 = vld [vmem:[%s152 + $0x2bc] sm:%s145]
                %349 = vst [vmem:[%s153 + $0x184] sm:%s145] %v348
                %v350 = vld [vmem:[%s152 + $0x2c0] sm:%s145]
                %351 = vst [vmem:[%s153 + $0x188] sm:%s145] %v350
                %v352 = vld [vmem:[%s152 + $0x2c4] sm:%s145]
                %353 = vst [vmem:[%s153 + $0x18c] sm:%s145] %v352
                %v354 = vld [vmem:[%s152 + $0x2c8] sm:%s145]
                %355 = vst [vmem:[%s153 + $0x190] sm:%s145] %v354
                %v356 = vld [vmem:[%s152 + $0x2cc] sm:%s145]
                %357 = vst [vmem:[%s153 + $0x194] sm:%s145] %v356
                %v358 = vld [vmem:[%s152 + $0x2d0] sm:%s145]
                %359 = vst [vmem:[%s153 + $0x198] sm:%s145] %v358
                %v360 = vld [vmem:[%s152 + $0x2d4] sm:%s145]
                %361 = vst [vmem:[%s153 + $0x19c] sm:%s145] %v360
              $region45: #{net_forward.3} parent=39 // loop_footer
                %s151 = sadd.s32 1, %s147
              $region46: #{net_forward.3} parent=39 // loop_footer_branch
                %146 = sbr.rel target = $region42
              $region47: #{net_forward.3} parent=39 // loop_exit
                _
            $region40: #{net_forward.3} parent=31 // pred_fallthru
              _
          $region32: #{net_forward.3} parent=27 // pred_fallthru
            _
          %590 = vnop
        $region28: #{net_forward.3} parent=23 // pred_fallthru
          _
      $region24: #{net_forward.3} parent=5 // pred_fallthru
        _
      %p591 = scmp.le.s32.totalorder 1, %s9
      %p592 = scmp.lt.s32.totalorder %s9, 3
      %p593 = pnand %p591, %p592
      %p594 = pneg %p593
      // Predicated region
      $region66: #{net_forward.3} parent=5 // pred_check
        _
      $region67: #{net_forward.3} parent=5 // pred_check_branch
        %596 = sbr.rel (%p593) target = $region69
      $region68: #{net_forward.3} parent=5 // pred_region
        %s597 = ssub.s32 %s9, 1
        %s598 = sand.u32 %s22, 1
        %s599 = sand.u32 %s22, 1
        %s600 = smul.addr %s599, 416
        %s601 = scalar_lea.vmem [#allocation2], %s600
        // Predicated region
        $region70: #{net_forward.3} parent=68 // pred_check
          %p602 = pneg %p35
        $region71: #{net_forward.3} parent=68 // pred_check_branch
          %604 = sbr.rel (%p602) target = $region73
        $region72: #{net_forward.3} parent=68 // pred_region
          _
        $region73: #{net_forward.3} parent=68 // pred_fallthru
          _
        %s605 = sand.u32 %s22, 1
        %s606 = sand.u32 %s22, 1
        %s607 = smul.addr %s606, 416
        %s608 = scalar_lea.vmem [#allocation2], %s607
        %p609 = pneg %p35
        %p610 = pneg %p32
        %p611 = pneg %p56
        %p612 = pneg %p53
        %p613 = pneg %p77
        %p614 = pneg %p74
        %p615 = pneg %p103
        %p616 = pneg %p100
        %s617 = smul.u32 26, %s14
        %p618 = scmp.lt.s32.totalorder %s617, 51
        %s619 = scalar_select %p618, %s617, 51
        %s620 = smul.addr %s619, 8
        %s621 = scalar_lea.vmem %s3, %s620
        %s622 = smul.u32 26, %s14
        %s623 = smul.u32 26, %s14
        %p624 = scmp.lt.s32.totalorder %s623, 51
        %s625 = scalar_select %p624, %s623, 51
        %s626 = smul.addr %s625, 8
        %s627 = scalar_lea.vmem %s3, %s626
        %s628 = smul.u32 26, %s14
        %v630 = vld [vmem:[%s1] sm:$0xf]
        %v631 = vld [vmem:[%s1 + $0x4] sm:$0xf]
        %v632 = vld [vmem:[%s1 + $0x8] sm:$0xf]
        %v633 = vld [vmem:[%s1 + $0xc] sm:$0xf]
        %v634 = vld [vmem:[%s1 + $0x10] sm:$0xf]
        %v635 = vld [vmem:[%s1 + $0x14] sm:$0xf]
        %v636 = vld [vmem:[%s1 + $0x18] sm:$0xf]
        %v637 = vld [vmem:[%s1 + $0x1c] sm:$0xf]
        %v638 = vld [vmem:[%s1 + $0x20] sm:$0xf]
        %v639 = vld [vmem:[%s1 + $0x24] sm:$0x3]
        %v640 = vld [vmem:[%s601] sm:$0xf]
        %v641 = vld [vmem:[%s601 + $0x4] sm:$0xf]
        %v642 = vld [vmem:[%s601 + $0x8] sm:$0xf]
        %v643 = vld [vmem:[%s601 + $0xc] sm:$0xf]
        %v644 = vld [vmem:[%s601 + $0x10] sm:$0xf]
        %v645 = vld [vmem:[%s601 + $0x14] sm:$0xf]
        %v646 = vld [vmem:[%s601 + $0x18] sm:$0xf]
        %v647 = vld [vmem:[%s601 + $0x1c] sm:$0xf]
        %v648 = vld [vmem:[%s601 + $0x20] sm:$0xf]
        %v649 = vld [vmem:[%s601 + $0x24] sm:$0xf]
        %v650 = vld [vmem:[%s601 + $0x28] sm:$0xf]
        %v651 = vld [vmem:[%s601 + $0x2c] sm:$0xf]
        %v652 = vld [vmem:[%s601 + $0x30] sm:$0xf]
        %v653 = vld [vmem:[%s601 + $0x34] sm:$0xf]
        %v654 = vld [vmem:[%s601 + $0x38] sm:$0xf]
        %v655 = vld [vmem:[%s601 + $0x3c] sm:$0xf]
        %v656 = vld [vmem:[%s601 + $0x40] sm:$0xf]
        %v657 = vld [vmem:[%s601 + $0x44] sm:$0xf]
        %v658 = vld [vmem:[%s601 + $0x48] sm:$0xf]
        %v659 = vld [vmem:[%s601 + $0x4c] sm:$0xf]
        %v660 = vld [vmem:[%s601 + $0x50] sm:$0xf]
        %v661 = vld [vmem:[%s601 + $0x54] sm:$0xf]
        %v662 = vld [vmem:[%s601 + $0x58] sm:$0xf]
        %v663 = vld [vmem:[%s601 + $0x5c] sm:$0xf]
        %v664 = vld [vmem:[%s601 + $0x60] sm:$0xf]
        %v665 = vld [vmem:[%s601 + $0x64] sm:$0xf]
        %v692 = vunpack.c.l.b16 %v640
        %v693 = vunpack.c.l.b16 %v641
        %v694 = vunpack.c.l.b16 %v642
        %v695 = vunpack.c.l.b16 %v643
        %v696 = vunpack.c.l.b16 %v644
        %v697 = vunpack.c.l.b16 %v645
        %v698 = vunpack.c.l.b16 %v646
        %v699 = vunpack.c.l.b16 %v647
        %v700 = vunpack.c.l.b16 %v648
        %v701 = vunpack.c.l.b16 %v649
        %v702 = vunpack.c.l.b16 %v650
        %v703 = vunpack.c.l.b16 %v651
        %v704 = vunpack.c.l.b16 %v652
        %v705 = vunpack.c.l.b16 %v653
        %v706 = vunpack.c.l.b16 %v654
        %v707 = vunpack.c.l.b16 %v655
        %v708 = vunpack.c.l.b16 %v656
        %v709 = vunpack.c.l.b16 %v657
        %v710 = vunpack.c.l.b16 %v658
        %v711 = vunpack.c.l.b16 %v659
        %v712 = vunpack.c.l.b16 %v660
        %v713 = vunpack.c.l.b16 %v661
        %v714 = vunpack.c.l.b16 %v662
        %v715 = vunpack.c.l.b16 %v663
        %v716 = vunpack.c.l.b16 %v664
        %v717 = vunpack.c.l.b16 %v665
        %v718 = vpack.c.b16 %v693, %v692
        %v719 = vpack.c.b16 %v695, %v694
        %v720 = vpack.c.b16 %v697, %v696
        %v721 = vpack.c.b16 %v699, %v698
        %v722 = vpack.c.b16 %v701, %v700
        %v723 = vpack.c.b16 %v703, %v702
        %v724 = vpack.c.b16 %v705, %v704
        %v725 = vpack.c.b16 %v707, %v706
        %v726 = vpack.c.b16 %v709, %v708
        %v727 = vpack.c.b16 %v711, %v710
        %v728 = vpack.c.b16 %v713, %v712
        %v729 = vpack.c.b16 %v715, %v714
        %v730 = vpack.c.b16 %v717, %v716
        %v741 = vunpack.c.l.b16 %v630
        %v742 = vunpack.c.l.b16 %v631
        %v743 = vunpack.c.l.b16 %v632
        %v744 = vunpack.c.l.b16 %v633
        %v745 = vunpack.c.l.b16 %v634
        %v746 = vunpack.c.l.b16 %v635
        %v747 = vunpack.c.l.b16 %v636
        %v748 = vunpack.c.l.b16 %v637
        %v749 = vunpack.c.l.b16 %v638
        %v750 = vunpack.c.l.b16 %v639
        %v751 = vpack.c.b16 %v742, %v741
        %v752 = vpack.c.b16 %v744, %v743
        %v753 = vpack.c.b16 %v746, %v745
        %v754 = vpack.c.b16 %v748, %v747
        %v755 = vpack.c.b16 %v750, %v749
        %vm760 = vcmask 613376
        %v762 = vsel %vm760, %v718, 0
        %v765 = vsel %vm760, %v719, 0
        %v768 = vsel %vm760, %v720, 0
        %v771 = vsel %vm760, %v721, 0
        %v774 = vsel %vm760, %v722, 0
        %v777 = vsel %vm760, %v723, 0
        %v780 = vsel %vm760, %v724, 0
        %v783 = vsel %vm760, %v725, 0
        %v786 = vsel %vm760, %v726, 0
        %v789 = vsel %vm760, %v727, 0
        %v792 = vsel %vm760, %v728, 0
        %v795 = vsel %vm760, %v729, 0
        %v798 = vsel %vm760, %v730, 0
        %vm800 = vcmask 1044480
        %vm801 = vcmask 1045504
        %v802 = vsel %vm800, 4294967295, 65535
        %v803 = vsel %vm801, %v802, 0
        %v805 = vand.u32 %v755, %v803
        %807 = vmatpush.bf16.msra.mxu0 0
        %808 = vmatpush.bf16.msra.mxu0 0
        %809 = vmatpush.bf16.msra.mxu0 0
        %810 = vmatpush.bf16.msra.mxu0 %v805
        %811 = vmatpush.bf16.msra.mxu0 %v754
        %812 = vmatpush.bf16.msra.mxu0 %v753
        %813 = vmatpush.bf16.msra.mxu0 %v752
        %814 = vmatpush.bf16.msra.mxu0 %v751
        %815 = vmatmul.bf16.gmra.mxu0 %v762
        %v816 = vpop.f32.mrf.mxu0
        %v817 = vadd.f32 0.0, %v816
        %v818 = vpop.f32.mrf.mxu0
        %v819 = vadd.f32 0.0, %v818
        %820 = vmatmul.bf16.gmra.mxu0 %v765
        %v821 = vpop.f32.mrf.mxu0
        %v822 = vadd.f32 0.0, %v821
        %v823 = vpop.f32.mrf.mxu0
        %v824 = vadd.f32 0.0, %v823
        %825 = vmatmul.bf16.gmra.mxu0 %v768
        %v826 = vpop.f32.mrf.mxu0
        %v827 = vadd.f32 0.0, %v826
        %v828 = vpop.f32.mrf.mxu0
        %v829 = vadd.f32 0.0, %v828
        %830 = vmatmul.bf16.gmra.mxu0 %v771
        %v831 = vpop.f32.mrf.mxu0
        %v832 = vadd.f32 0.0, %v831
        %v833 = vpop.f32.mrf.mxu0
        %v834 = vadd.f32 0.0, %v833
        %835 = vmatmul.bf16.gmra.mxu0 %v774
        %v836 = vpop.f32.mrf.mxu0
        %v837 = vadd.f32 0.0, %v836
        %v838 = vpop.f32.mrf.mxu0
        %v839 = vadd.f32 0.0, %v838
        %840 = vmatmul.bf16.gmra.mxu0 %v777
        %v841 = vpop.f32.mrf.mxu0
        %v842 = vadd.f32 0.0, %v841
        %v843 = vpop.f32.mrf.mxu0
        %v844 = vadd.f32 0.0, %v843
        %845 = vmatmul.bf16.gmra.mxu0 %v780
        %v846 = vpop.f32.mrf.mxu0
        %v847 = vadd.f32 0.0, %v846
        %v848 = vpop.f32.mrf.mxu0
        %v849 = vadd.f32 0.0, %v848
        %850 = vmatmul.bf16.gmra.mxu0 %v783
        %v851 = vpop.f32.mrf.mxu0
        %v852 = vadd.f32 0.0, %v851
        %v853 = vpop.f32.mrf.mxu0
        %v854 = vadd.f32 0.0, %v853
        %855 = vmatmul.bf16.gmra.mxu0 %v786
        %v856 = vpop.f32.mrf.mxu0
        %v857 = vadd.f32 0.0, %v856
        %v858 = vpop.f32.mrf.mxu0
        %v859 = vadd.f32 0.0, %v858
        %860 = vmatmul.bf16.gmra.mxu0 %v789
        %v861 = vpop.f32.mrf.mxu0
        %v862 = vadd.f32 0.0, %v861
        %v863 = vpop.f32.mrf.mxu0
        %v864 = vadd.f32 0.0, %v863
        %865 = vmatmul.bf16.gmra.mxu0 %v792
        %v866 = vpop.f32.mrf.mxu0
        %v867 = vadd.f32 0.0, %v866
        %v868 = vpop.f32.mrf.mxu0
        %v869 = vadd.f32 0.0, %v868
        %870 = vmatmul.bf16.gmra.mxu0 %v795
        %v871 = vpop.f32.mrf.mxu0
        %v872 = vadd.f32 0.0, %v871
        %v873 = vpop.f32.mrf.mxu0
        %v874 = vadd.f32 0.0, %v873
        %875 = vmatmul.bf16.gmra.mxu0 %v798
        %v876 = vpop.f32.mrf.mxu0
        %v877 = vadd.f32 0.0, %v876
        %v878 = vpop.f32.mrf.mxu0
        %v879 = vadd.f32 0.0, %v878
        %880 = vdwg.mxu0
        %s881 = scalar_lea.vmem %s601, 104 [#allocation2]
        %v882 = vld [vmem:[%s881] sm:$0xf]
        %v883 = vld [vmem:[%s881 + $0x4] sm:$0xf]
        %v884 = vld [vmem:[%s881 + $0x8] sm:$0xf]
        %v885 = vld [vmem:[%s881 + $0xc] sm:$0xf]
        %v886 = vld [vmem:[%s881 + $0x10] sm:$0xf]
        %v887 = vld [vmem:[%s881 + $0x14] sm:$0xf]
        %v888 = vld [vmem:[%s881 + $0x18] sm:$0xf]
        %v889 = vld [vmem:[%s881 + $0x1c] sm:$0xf]
        %v890 = vld [vmem:[%s881 + $0x20] sm:$0xf]
        %v891 = vld [vmem:[%s881 + $0x24] sm:$0xf]
        %v892 = vld [vmem:[%s881 + $0x28] sm:$0xf]
        %v893 = vld [vmem:[%s881 + $0x2c] sm:$0xf]
        %v894 = vld [vmem:[%s881 + $0x30] sm:$0xf]
        %v895 = vld [vmem:[%s881 + $0x34] sm:$0xf]
        %v896 = vld [vmem:[%s881 + $0x38] sm:$0xf]
        %v897 = vld [vmem:[%s881 + $0x3c] sm:$0xf]
        %v898 = vld [vmem:[%s881 + $0x40] sm:$0xf]
        %v899 = vld [vmem:[%s881 + $0x44] sm:$0xf]
        %v900 = vld [vmem:[%s881 + $0x48] sm:$0xf]
        %v901 = vld [vmem:[%s881 + $0x4c] sm:$0xf]
        %v902 = vld [vmem:[%s881 + $0x50] sm:$0xf]
        %v903 = vld [vmem:[%s881 + $0x54] sm:$0xf]
        %v904 = vld [vmem:[%s881 + $0x58] sm:$0xf]
        %v905 = vld [vmem:[%s881 + $0x5c] sm:$0xf]
        %v906 = vld [vmem:[%s881 + $0x60] sm:$0xf]
        %v907 = vld [vmem:[%s881 + $0x64] sm:$0xf]
        %v934 = vunpack.c.l.b16 %v882
        %v935 = vunpack.c.l.b16 %v883
        %v936 = vunpack.c.l.b16 %v884
        %v937 = vunpack.c.l.b16 %v885
        %v938 = vunpack.c.l.b16 %v886
        %v939 = vunpack.c.l.b16 %v887
        %v940 = vunpack.c.l.b16 %v888
        %v941 = vunpack.c.l.b16 %v889
        %v942 = vunpack.c.l.b16 %v890
        %v943 = vunpack.c.l.b16 %v891
        %v944 = vunpack.c.l.b16 %v892
        %v945 = vunpack.c.l.b16 %v893
        %v946 = vunpack.c.l.b16 %v894
        %v947 = vunpack.c.l.b16 %v895
        %v948 = vunpack.c.l.b16 %v896
        %v949 = vunpack.c.l.b16 %v897
        %v950 = vunpack.c.l.b16 %v898
        %v951 = vunpack.c.l.b16 %v899
        %v952 = vunpack.c.l.b16 %v900
        %v953 = vunpack.c.l.b16 %v901
        %v954 = vunpack.c.l.b16 %v902
        %v955 = vunpack.c.l.b16 %v903
        %v956 = vunpack.c.l.b16 %v904
        %v957 = vunpack.c.l.b16 %v905
        %v958 = vunpack.c.l.b16 %v906
        %v959 = vunpack.c.l.b16 %v907
        %v960 = vpack.c.b16 %v935, %v934
        %v961 = vpack.c.b16 %v937, %v936
        %v962 = vpack.c.b16 %v939, %v938
        %v963 = vpack.c.b16 %v941, %v940
        %v964 = vpack.c.b16 %v943, %v942
        %v965 = vpack.c.b16 %v945, %v944
        %v966 = vpack.c.b16 %v947, %v946
        %v967 = vpack.c.b16 %v949, %v948
        %v968 = vpack.c.b16 %v951, %v950
        %v969 = vpack.c.b16 %v953, %v952
        %v970 = vpack.c.b16 %v955, %v954
        %v971 = vpack.c.b16 %v957, %v956
        %v972 = vpack.c.b16 %v959, %v958
        %v974 = vsel %vm760, %v960, 0
        %v977 = vsel %vm760, %v961, 0
        %v980 = vsel %vm760, %v962, 0
        %v983 = vsel %vm760, %v963, 0
        %v986 = vsel %vm760, %v964, 0
        %v989 = vsel %vm760, %v965, 0
        %v992 = vsel %vm760, %v966, 0
        %v995 = vsel %vm760, %v967, 0
        %v998 = vsel %vm760, %v968, 0
        %v1001 = vsel %vm760, %v969, 0
        %v1004 = vsel %vm760, %v970, 0
        %v1007 = vsel %vm760, %v971, 0
        %v1010 = vsel %vm760, %v972, 0
        %1012 = vmatpush.bf16.msra.mxu0 0
        %1013 = vmatpush.bf16.msra.mxu0 0
        %1014 = vmatpush.bf16.msra.mxu0 0
        %1015 = vmatpush.bf16.msra.mxu0 %v805
        %1016 = vmatpush.bf16.msra.mxu0 %v754
        %1017 = vmatpush.bf16.msra.mxu0 %v753
        %1018 = vmatpush.bf16.msra.mxu0 %v752
        %1019 = vmatpush.bf16.msra.mxu0 %v751
        %1020 = vmatmul.bf16.gmra.mxu0 %v974
        %v1021 = vpop.f32.mrf.mxu0
        %v1022 = vadd.f32 0.0, %v1021
        %v1023 = vpop.f32.mrf.mxu0
        %v1024 = vadd.f32 0.0, %v1023
        %1025 = vmatmul.bf16.gmra.mxu0 %v977
        %v1026 = vpop.f32.mrf.mxu0
        %v1027 = vadd.f32 0.0, %v1026
        %v1028 = vpop.f32.mrf.mxu0
        %v1029 = vadd.f32 0.0, %v1028
        %1030 = vmatmul.bf16.gmra.mxu0 %v980
        %v1031 = vpop.f32.mrf.mxu0
        %v1032 = vadd.f32 0.0, %v1031
        %v1033 = vpop.f32.mrf.mxu0
        %v1034 = vadd.f32 0.0, %v1033
        %1035 = vmatmul.bf16.gmra.mxu0 %v983
        %v1036 = vpop.f32.mrf.mxu0
        %v1037 = vadd.f32 0.0, %v1036
        %v1038 = vpop.f32.mrf.mxu0
        %v1039 = vadd.f32 0.0, %v1038
        %1040 = vmatmul.bf16.gmra.mxu0 %v986
        %v1041 = vpop.f32.mrf.mxu0
        %v1042 = vadd.f32 0.0, %v1041
        %v1043 = vpop.f32.mrf.mxu0
        %v1044 = vadd.f32 0.0, %v1043
        %1045 = vmatmul.bf16.gmra.mxu0 %v989
        %v1046 = vpop.f32.mrf.mxu0
        %v1047 = vadd.f32 0.0, %v1046
        %v1048 = vpop.f32.mrf.mxu0
        %v1049 = vadd.f32 0.0, %v1048
        %1050 = vmatmul.bf16.gmra.mxu0 %v992
        %v1051 = vpop.f32.mrf.mxu0
        %v1052 = vadd.f32 0.0, %v1051
        %v1053 = vpop.f32.mrf.mxu0
        %v1054 = vadd.f32 0.0, %v1053
        %1055 = vmatmul.bf16.gmra.mxu0 %v995
        %v1056 = vpop.f32.mrf.mxu0
        %v1057 = vadd.f32 0.0, %v1056
        %v1058 = vpop.f32.mrf.mxu0
        %v1059 = vadd.f32 0.0, %v1058
        %1060 = vmatmul.bf16.gmra.mxu0 %v998
        %v1061 = vpop.f32.mrf.mxu0
        %v1062 = vadd.f32 0.0, %v1061
        %v1063 = vpop.f32.mrf.mxu0
        %v1064 = vadd.f32 0.0, %v1063
        %1065 = vmatmul.bf16.gmra.mxu0 %v1001
        %v1066 = vpop.f32.mrf.mxu0
        %v1067 = vadd.f32 0.0, %v1066
        %v1068 = vpop.f32.mrf.mxu0
        %v1069 = vadd.f32 0.0, %v1068
        %1070 = vmatmul.bf16.gmra.mxu0 %v1004
        %v1071 = vpop.f32.mrf.mxu0
        %v1072 = vadd.f32 0.0, %v1071
        %v1073 = vpop.f32.mrf.mxu0
        %v1074 = vadd.f32 0.0, %v1073
        %1075 = vmatmul.bf16.gmra.mxu0 %v1007
        %v1076 = vpop.f32.mrf.mxu0
        %v1077 = vadd.f32 0.0, %v1076
        %v1078 = vpop.f32.mrf.mxu0
        %v1079 = vadd.f32 0.0, %v1078
        %1080 = vmatmul.bf16.gmra.mxu0 %v1010
        %v1081 = vpop.f32.mrf.mxu0
        %v1082 = vadd.f32 0.0, %v1081
        %v1083 = vpop.f32.mrf.mxu0
        %v1084 = vadd.f32 0.0, %v1083
        %1085 = vdwg.mxu0
        %v1086 = vmax.f32 %v817, %v1022
        %v1087 = vmax.f32 %v819, %v1024
        %v1088 = vmax.f32 %v822, %v1027
        %v1089 = vmax.f32 %v824, %v1029
        %v1090 = vmax.f32 %v827, %v1032
        %v1091 = vmax.f32 %v829, %v1034
        %v1092 = vmax.f32 %v832, %v1037
        %v1093 = vmax.f32 %v834, %v1039
        %v1094 = vmax.f32 %v837, %v1042
        %v1095 = vmax.f32 %v839, %v1044
        %v1096 = vmax.f32 %v842, %v1047
        %v1097 = vmax.f32 %v844, %v1049
        %v1098 = vmax.f32 %v847, %v1052
        %v1099 = vmax.f32 %v849, %v1054
        %v1100 = vmax.f32 %v852, %v1057
        %v1101 = vmax.f32 %v854, %v1059
        %v1102 = vmax.f32 %v857, %v1062
        %v1103 = vmax.f32 %v859, %v1064
        %v1104 = vmax.f32 %v862, %v1067
        %v1105 = vmax.f32 %v864, %v1069
        %v1106 = vmax.f32 %v867, %v1072
        %v1107 = vmax.f32 %v869, %v1074
        %v1108 = vmax.f32 %v872, %v1077
        %v1109 = vmax.f32 %v874, %v1079
        %v1110 = vmax.f32 %v877, %v1082
        %v1111 = vmax.f32 %v879, %v1084
        %s1112 = scalar_lea.vmem %s601, 208 [#allocation2]
        %v1113 = vld [vmem:[%s1112] sm:$0xf]
        %v1114 = vld [vmem:[%s1112 + $0x4] sm:$0xf]
        %v1115 = vld [vmem:[%s1112 + $0x8] sm:$0xf]
        %v1116 = vld [vmem:[%s1112 + $0xc] sm:$0xf]
        %v1117 = vld [vmem:[%s1112 + $0x10] sm:$0xf]
        %v1118 = vld [vmem:[%s1112 + $0x14] sm:$0xf]
        %v1119 = vld [vmem:[%s1112 + $0x18] sm:$0xf]
        %v1120 = vld [vmem:[%s1112 + $0x1c] sm:$0xf]
        %v1121 = vld [vmem:[%s1112 + $0x20] sm:$0xf]
        %v1122 = vld [vmem:[%s1112 + $0x24] sm:$0xf]
        %v1123 = vld [vmem:[%s1112 + $0x28] sm:$0xf]
        %v1124 = vld [vmem:[%s1112 + $0x2c] sm:$0xf]
        %v1125 = vld [vmem:[%s1112 + $0x30] sm:$0xf]
        %v1126 = vld [vmem:[%s1112 + $0x34] sm:$0xf]
        %v1127 = vld [vmem:[%s1112 + $0x38] sm:$0xf]
        %v1128 = vld [vmem:[%s1112 + $0x3c] sm:$0xf]
        %v1129 = vld [vmem:[%s1112 + $0x40] sm:$0xf]
        %v1130 = vld [vmem:[%s1112 + $0x44] sm:$0xf]
        %v1131 = vld [vmem:[%s1112 + $0x48] sm:$0xf]
        %v1132 = vld [vmem:[%s1112 + $0x4c] sm:$0xf]
        %v1133 = vld [vmem:[%s1112 + $0x50] sm:$0xf]
        %v1134 = vld [vmem:[%s1112 + $0x54] sm:$0xf]
        %v1135 = vld [vmem:[%s1112 + $0x58] sm:$0xf]
        %v1136 = vld [vmem:[%s1112 + $0x5c] sm:$0xf]
        %v1137 = vld [vmem:[%s1112 + $0x60] sm:$0xf]
        %v1138 = vld [vmem:[%s1112 + $0x64] sm:$0xf]
        %v1165 = vunpack.c.l.b16 %v1113
        %v1166 = vunpack.c.l.b16 %v1114
        %v1167 = vunpack.c.l.b16 %v1115
        %v1168 = vunpack.c.l.b16 %v1116
        %v1169 = vunpack.c.l.b16 %v1117
        %v1170 = vunpack.c.l.b16 %v1118
        %v1171 = vunpack.c.l.b16 %v1119
        %v1172 = vunpack.c.l.b16 %v1120
        %v1173 = vunpack.c.l.b16 %v1121
        %v1174 = vunpack.c.l.b16 %v1122
        %v1175 = vunpack.c.l.b16 %v1123
        %v1176 = vunpack.c.l.b16 %v1124
        %v1177 = vunpack.c.l.b16 %v1125
        %v1178 = vunpack.c.l.b16 %v1126
        %v1179 = vunpack.c.l.b16 %v1127
        %v1180 = vunpack.c.l.b16 %v1128
        %v1181 = vunpack.c.l.b16 %v1129
        %v1182 = vunpack.c.l.b16 %v1130
        %v1183 = vunpack.c.l.b16 %v1131
        %v1184 = vunpack.c.l.b16 %v1132
        %v1185 = vunpack.c.l.b16 %v1133
        %v1186 = vunpack.c.l.b16 %v1134
        %v1187 = vunpack.c.l.b16 %v1135
        %v1188 = vunpack.c.l.b16 %v1136
        %v1189 = vunpack.c.l.b16 %v1137
        %v1190 = vunpack.c.l.b16 %v1138
        %v1191 = vpack.c.b16 %v1166, %v1165
        %v1192 = vpack.c.b16 %v1168, %v1167
        %v1193 = vpack.c.b16 %v1170, %v1169
        %v1194 = vpack.c.b16 %v1172, %v1171
        %v1195 = vpack.c.b16 %v1174, %v1173
        %v1196 = vpack.c.b16 %v1176, %v1175
        %v1197 = vpack.c.b16 %v1178, %v1177
        %v1198 = vpack.c.b16 %v1180, %v1179
        %v1199 = vpack.c.b16 %v1182, %v1181
        %v1200 = vpack.c.b16 %v1184, %v1183
        %v1201 = vpack.c.b16 %v1186, %v1185
        %v1202 = vpack.c.b16 %v1188, %v1187
        %v1203 = vpack.c.b16 %v1190, %v1189
        %v1205 = vsel %vm760, %v1191, 0
        %v1208 = vsel %vm760, %v1192, 0
        %v1211 = vsel %vm760, %v1193, 0
        %v1214 = vsel %vm760, %v1194, 0
        %v1217 = vsel %vm760, %v1195, 0
        %v1220 = vsel %vm760, %v1196, 0
        %v1223 = vsel %vm760, %v1197, 0
        %v1226 = vsel %vm760, %v1198, 0
        %v1229 = vsel %vm760, %v1199, 0
        %v1232 = vsel %vm760, %v1200, 0
        %v1235 = vsel %vm760, %v1201, 0
        %v1238 = vsel %vm760, %v1202, 0
        %v1241 = vsel %vm760, %v1203, 0
        %1243 = vmatpush.bf16.msra.mxu0 0
        %1244 = vmatpush.bf16.msra.mxu0 0
        %1245 = vmatpush.bf16.msra.mxu0 0
        %1246 = vmatpush.bf16.msra.mxu0 %v805
        %1247 = vmatpush.bf16.msra.mxu0 %v754
        %1248 = vmatpush.bf16.msra.mxu0 %v753
        %1249 = vmatpush.bf16.msra.mxu0 %v752
        %1250 = vmatpush.bf16.msra.mxu0 %v751
        %1251 = vmatmul.bf16.gmra.mxu0 %v1205
        %v1252 = vpop.f32.mrf.mxu0
        %v1253 = vadd.f32 0.0, %v1252
        %v1254 = vpop.f32.mrf.mxu0
        %v1255 = vadd.f32 0.0, %v1254
        %1256 = vmatmul.bf16.gmra.mxu0 %v1208
        %v1257 = vpop.f32.mrf.mxu0
        %v1258 = vadd.f32 0.0, %v1257
        %v1259 = vpop.f32.mrf.mxu0
        %v1260 = vadd.f32 0.0, %v1259
        %1261 = vmatmul.bf16.gmra.mxu0 %v1211
        %v1262 = vpop.f32.mrf.mxu0
        %v1263 = vadd.f32 0.0, %v1262
        %v1264 = vpop.f32.mrf.mxu0
        %v1265 = vadd.f32 0.0, %v1264
        %1266 = vmatmul.bf16.gmra.mxu0 %v1214
        %v1267 = vpop.f32.mrf.mxu0
        %v1268 = vadd.f32 0.0, %v1267
        %v1269 = vpop.f32.mrf.mxu0
        %v1270 = vadd.f32 0.0, %v1269
        %1271 = vmatmul.bf16.gmra.mxu0 %v1217
        %v1272 = vpop.f32.mrf.mxu0
        %v1273 = vadd.f32 0.0, %v1272
        %v1274 = vpop.f32.mrf.mxu0
        %v1275 = vadd.f32 0.0, %v1274
        %1276 = vmatmul.bf16.gmra.mxu0 %v1220
        %v1277 = vpop.f32.mrf.mxu0
        %v1278 = vadd.f32 0.0, %v1277
        %v1279 = vpop.f32.mrf.mxu0
        %v1280 = vadd.f32 0.0, %v1279
        %1281 = vmatmul.bf16.gmra.mxu0 %v1223
        %v1282 = vpop.f32.mrf.mxu0
        %v1283 = vadd.f32 0.0, %v1282
        %v1284 = vpop.f32.mrf.mxu0
        %v1285 = vadd.f32 0.0, %v1284
        %1286 = vmatmul.bf16.gmra.mxu0 %v1226
        %v1287 = vpop.f32.mrf.mxu0
        %v1288 = vadd.f32 0.0, %v1287
        %v1289 = vpop.f32.mrf.mxu0
        %v1290 = vadd.f32 0.0, %v1289
        %1291 = vmatmul.bf16.gmra.mxu0 %v1229
        %v1292 = vpop.f32.mrf.mxu0
        %v1293 = vadd.f32 0.0, %v1292
        %v1294 = vpop.f32.mrf.mxu0
        %v1295 = vadd.f32 0.0, %v1294
        %1296 = vmatmul.bf16.gmra.mxu0 %v1232
        %v1297 = vpop.f32.mrf.mxu0
        %v1298 = vadd.f32 0.0, %v1297
        %v1299 = vpop.f32.mrf.mxu0
        %v1300 = vadd.f32 0.0, %v1299
        %1301 = vmatmul.bf16.gmra.mxu0 %v1235
        %v1302 = vpop.f32.mrf.mxu0
        %v1303 = vadd.f32 0.0, %v1302
        %v1304 = vpop.f32.mrf.mxu0
        %v1305 = vadd.f32 0.0, %v1304
        %1306 = vmatmul.bf16.gmra.mxu0 %v1238
        %v1307 = vpop.f32.mrf.mxu0
        %v1308 = vadd.f32 0.0, %v1307
        %v1309 = vpop.f32.mrf.mxu0
        %v1310 = vadd.f32 0.0, %v1309
        %1311 = vmatmul.bf16.gmra.mxu0 %v1241
        %v1312 = vpop.f32.mrf.mxu0
        %v1313 = vadd.f32 0.0, %v1312
        %v1314 = vpop.f32.mrf.mxu0
        %v1315 = vadd.f32 0.0, %v1314
        %1316 = vdwg.mxu0
        %v1317 = vmax.f32 %v1086, %v1253
        %v1318 = vmax.f32 %v1087, %v1255
        %v1319 = vmax.f32 %v1088, %v1258
        %v1320 = vmax.f32 %v1089, %v1260
        %v1321 = vmax.f32 %v1090, %v1263
        %v1322 = vmax.f32 %v1091, %v1265
        %v1323 = vmax.f32 %v1092, %v1268
        %v1324 = vmax.f32 %v1093, %v1270
        %v1325 = vmax.f32 %v1094, %v1273
        %v1326 = vmax.f32 %v1095, %v1275
        %v1327 = vmax.f32 %v1096, %v1278
        %v1328 = vmax.f32 %v1097, %v1280
        %v1329 = vmax.f32 %v1098, %v1283
        %v1330 = vmax.f32 %v1099, %v1285
        %v1331 = vmax.f32 %v1100, %v1288
        %v1332 = vmax.f32 %v1101, %v1290
        %v1333 = vmax.f32 %v1102, %v1293
        %v1334 = vmax.f32 %v1103, %v1295
        %v1335 = vmax.f32 %v1104, %v1298
        %v1336 = vmax.f32 %v1105, %v1300
        %v1337 = vmax.f32 %v1106, %v1303
        %v1338 = vmax.f32 %v1107, %v1305
        %v1339 = vmax.f32 %v1108, %v1308
        %v1340 = vmax.f32 %v1109, %v1310
        %v1341 = vmax.f32 %v1110, %v1313
        %v1342 = vmax.f32 %v1111, %v1315
        %s1343 = scalar_lea.vmem %s601, 312 [#allocation2]
        %v1344 = vld [vmem:[%s1343] sm:$0xf]
        %v1345 = vld [vmem:[%s1343 + $0x4] sm:$0xf]
        %v1346 = vld [vmem:[%s1343 + $0x8] sm:$0xf]
        %v1347 = vld [vmem:[%s1343 + $0xc] sm:$0xf]
        %v1348 = vld [vmem:[%s1343 + $0x10] sm:$0xf]
        %v1349 = vld [vmem:[%s1343 + $0x14] sm:$0xf]
        %v1350 = vld [vmem:[%s1343 + $0x18] sm:$0xf]
        %v1351 = vld [vmem:[%s1343 + $0x1c] sm:$0xf]
        %v1352 = vld [vmem:[%s1343 + $0x20] sm:$0xf]
        %v1353 = vld [vmem:[%s1343 + $0x24] sm:$0xf]
        %v1354 = vld [vmem:[%s1343 + $0x28] sm:$0xf]
        %v1355 = vld [vmem:[%s1343 + $0x2c] sm:$0xf]
        %v1356 = vld [vmem:[%s1343 + $0x30] sm:$0xf]
        %v1357 = vld [vmem:[%s1343 + $0x34] sm:$0xf]
        %v1358 = vld [vmem:[%s1343 + $0x38] sm:$0xf]
        %v1359 = vld [vmem:[%s1343 + $0x3c] sm:$0xf]
        %v1360 = vld [vmem:[%s1343 + $0x40] sm:$0xf]
        %v1361 = vld [vmem:[%s1343 + $0x44] sm:$0xf]
        %v1362 = vld [vmem:[%s1343 + $0x48] sm:$0xf]
        %v1363 = vld [vmem:[%s1343 + $0x4c] sm:$0xf]
        %v1364 = vld [vmem:[%s1343 + $0x50] sm:$0xf]
        %v1365 = vld [vmem:[%s1343 + $0x54] sm:$0xf]
        %v1366 = vld [vmem:[%s1343 + $0x58] sm:$0xf]
        %v1367 = vld [vmem:[%s1343 + $0x5c] sm:$0xf]
        %v1368 = vld [vmem:[%s1343 + $0x60] sm:$0xf]
        %v1369 = vld [vmem:[%s1343 + $0x64] sm:$0xf]
        %v1396 = vunpack.c.l.b16 %v1344
        %v1397 = vunpack.c.l.b16 %v1345
        %v1398 = vunpack.c.l.b16 %v1346
        %v1399 = vunpack.c.l.b16 %v1347
        %v1400 = vunpack.c.l.b16 %v1348
        %v1401 = vunpack.c.l.b16 %v1349
        %v1402 = vunpack.c.l.b16 %v1350
        %v1403 = vunpack.c.l.b16 %v1351
        %v1404 = vunpack.c.l.b16 %v1352
        %v1405 = vunpack.c.l.b16 %v1353
        %v1406 = vunpack.c.l.b16 %v1354
        %v1407 = vunpack.c.l.b16 %v1355
        %v1408 = vunpack.c.l.b16 %v1356
        %v1409 = vunpack.c.l.b16 %v1357
        %v1410 = vunpack.c.l.b16 %v1358
        %v1411 = vunpack.c.l.b16 %v1359
        %v1412 = vunpack.c.l.b16 %v1360
        %v1413 = vunpack.c.l.b16 %v1361
        %v1414 = vunpack.c.l.b16 %v1362
        %v1415 = vunpack.c.l.b16 %v1363
        %v1416 = vunpack.c.l.b16 %v1364
        %v1417 = vunpack.c.l.b16 %v1365
        %v1418 = vunpack.c.l.b16 %v1366
        %v1419 = vunpack.c.l.b16 %v1367
        %v1420 = vunpack.c.l.b16 %v1368
        %v1421 = vunpack.c.l.b16 %v1369
        %v1422 = vpack.c.b16 %v1397, %v1396
        %v1423 = vpack.c.b16 %v1399, %v1398
        %v1424 = vpack.c.b16 %v1401, %v1400
        %v1425 = vpack.c.b16 %v1403, %v1402
        %v1426 = vpack.c.b16 %v1405, %v1404
        %v1427 = vpack.c.b16 %v1407, %v1406
        %v1428 = vpack.c.b16 %v1409, %v1408
        %v1429 = vpack.c.b16 %v1411, %v1410
        %v1430 = vpack.c.b16 %v1413, %v1412
        %v1431 = vpack.c.b16 %v1415, %v1414
        %v1432 = vpack.c.b16 %v1417, %v1416
        %v1433 = vpack.c.b16 %v1419, %v1418
        %v1434 = vpack.c.b16 %v1421, %v1420
        %v1436 = vsel %vm760, %v1422, 0
        %v1439 = vsel %vm760, %v1423, 0
        %v1442 = vsel %vm760, %v1424, 0
        %v1445 = vsel %vm760, %v1425, 0
        %v1448 = vsel %vm760, %v1426, 0
        %v1451 = vsel %vm760, %v1427, 0
        %v1454 = vsel %vm760, %v1428, 0
        %v1457 = vsel %vm760, %v1429, 0
        %v1460 = vsel %vm760, %v1430, 0
        %v1463 = vsel %vm760, %v1431, 0
        %v1466 = vsel %vm760, %v1432, 0
        %v1469 = vsel %vm760, %v1433, 0
        %v1472 = vsel %vm760, %v1434, 0
        %1474 = vmatpush.bf16.msra.mxu0 0
        %1475 = vmatpush.bf16.msra.mxu0 0
        %1476 = vmatpush.bf16.msra.mxu0 0
        %1477 = vmatpush.bf16.msra.mxu0 %v805
        %1478 = vmatpush.bf16.msra.mxu0 %v754
        %1479 = vmatpush.bf16.msra.mxu0 %v753
        %1480 = vmatpush.bf16.msra.mxu0 %v752
        %1481 = vmatpush.bf16.msra.mxu0 %v751
        %1482 = vmatmul.bf16.gmra.mxu0 %v1436
        %v1483 = vpop.f32.mrf.mxu0
        %v1484 = vadd.f32 0.0, %v1483
        %v1485 = vpop.f32.mrf.mxu0
        %v1486 = vadd.f32 0.0, %v1485
        %1487 = vmatmul.bf16.gmra.mxu0 %v1439
        %v1488 = vpop.f32.mrf.mxu0
        %v1489 = vadd.f32 0.0, %v1488
        %v1490 = vpop.f32.mrf.mxu0
        %v1491 = vadd.f32 0.0, %v1490
        %1492 = vmatmul.bf16.gmra.mxu0 %v1442
        %v1493 = vpop.f32.mrf.mxu0
        %v1494 = vadd.f32 0.0, %v1493
        %v1495 = vpop.f32.mrf.mxu0
        %v1496 = vadd.f32 0.0, %v1495
        %1497 = vmatmul.bf16.gmra.mxu0 %v1445
        %v1498 = vpop.f32.mrf.mxu0
        %v1499 = vadd.f32 0.0, %v1498
        %v1500 = vpop.f32.mrf.mxu0
        %v1501 = vadd.f32 0.0, %v1500
        %1502 = vmatmul.bf16.gmra.mxu0 %v1448
        %v1503 = vpop.f32.mrf.mxu0
        %v1504 = vadd.f32 0.0, %v1503
        %v1505 = vpop.f32.mrf.mxu0
        %v1506 = vadd.f32 0.0, %v1505
        %1507 = vmatmul.bf16.gmra.mxu0 %v1451
        %v1508 = vpop.f32.mrf.mxu0
        %v1509 = vadd.f32 0.0, %v1508
        %v1510 = vpop.f32.mrf.mxu0
        %v1511 = vadd.f32 0.0, %v1510
        %1512 = vmatmul.bf16.gmra.mxu0 %v1454
        %v1513 = vpop.f32.mrf.mxu0
        %v1514 = vadd.f32 0.0, %v1513
        %v1515 = vpop.f32.mrf.mxu0
        %v1516 = vadd.f32 0.0, %v1515
        %1517 = vmatmul.bf16.gmra.mxu0 %v1457
        %v1518 = vpop.f32.mrf.mxu0
        %v1519 = vadd.f32 0.0, %v1518
        %v1520 = vpop.f32.mrf.mxu0
        %v1521 = vadd.f32 0.0, %v1520
        %1522 = vmatmul.bf16.gmra.mxu0 %v1460
        %v1523 = vpop.f32.mrf.mxu0
        %v1524 = vadd.f32 0.0, %v1523
        %v1525 = vpop.f32.mrf.mxu0
        %v1526 = vadd.f32 0.0, %v1525
        %1527 = vmatmul.bf16.gmra.mxu0 %v1463
        %v1528 = vpop.f32.mrf.mxu0
        %v1529 = vadd.f32 0.0, %v1528
        %v1530 = vpop.f32.mrf.mxu0
        %v1531 = vadd.f32 0.0, %v1530
        %1532 = vmatmul.bf16.gmra.mxu0 %v1466
        %v1533 = vpop.f32.mrf.mxu0
        %v1534 = vadd.f32 0.0, %v1533
        %v1535 = vpop.f32.mrf.mxu0
        %v1536 = vadd.f32 0.0, %v1535
        %1537 = vmatmul.bf16.gmra.mxu0 %v1469
        %v1538 = vpop.f32.mrf.mxu0
        %v1539 = vadd.f32 0.0, %v1538
        %v1540 = vpop.f32.mrf.mxu0
        %v1541 = vadd.f32 0.0, %v1540
        %1542 = vmatmul.bf16.gmra.mxu0 %v1472
        %v1543 = vpop.f32.mrf.mxu0
        %v1544 = vadd.f32 0.0, %v1543
        %v1545 = vpop.f32.mrf.mxu0
        %v1546 = vadd.f32 0.0, %v1545
        %1547 = vdwg.mxu0
        %v1548 = vmax.f32 %v1317, %v1484
        %v1549 = vmax.f32 %v1318, %v1486
        %v1550 = vmax.f32 %v1319, %v1489
        %v1551 = vmax.f32 %v1320, %v1491
        %v1552 = vmax.f32 %v1321, %v1494
        %v1553 = vmax.f32 %v1322, %v1496
        %v1554 = vmax.f32 %v1323, %v1499
        %v1555 = vmax.f32 %v1324, %v1501
        %v1556 = vmax.f32 %v1325, %v1504
        %v1557 = vmax.f32 %v1326, %v1506
        %v1558 = vmax.f32 %v1327, %v1509
        %v1559 = vmax.f32 %v1328, %v1511
        %v1560 = vmax.f32 %v1329, %v1514
        %v1561 = vmax.f32 %v1330, %v1516
        %v1562 = vmax.f32 %v1331, %v1519
        %v1563 = vmax.f32 %v1332, %v1521
        %v1564 = vmax.f32 %v1333, %v1524
        %v1565 = vmax.f32 %v1334, %v1526
        %v1566 = vmax.f32 %v1335, %v1529
        %v1567 = vmax.f32 %v1336, %v1531
        %v1568 = vmax.f32 %v1337, %v1534
        %v1569 = vmax.f32 %v1338, %v1536
        %v1570 = vmax.f32 %v1339, %v1539
        %v1571 = vmax.f32 %v1340, %v1541
        %v1572 = vmax.f32 %v1341, %v1544
        %v1573 = vmax.f32 %v1342, %v1546
        %v1574 = vld [vmem:[%s2] sm:$0x1]
        %v1576 = vperm.slane %v1574, 0
        %v1578 = vadd.f32 %v1548, %v1576
        %v1579 = vadd.f32 %v1549, %v1576
        %v1580 = vadd.f32 %v1550, %v1576
        %v1581 = vadd.f32 %v1551, %v1576
        %v1582 = vadd.f32 %v1552, %v1576
        %v1583 = vadd.f32 %v1553, %v1576
        %v1584 = vadd.f32 %v1554, %v1576
        %v1585 = vadd.f32 %v1555, %v1576
        %v1586 = vadd.f32 %v1556, %v1576
        %v1587 = vadd.f32 %v1557, %v1576
        %v1588 = vadd.f32 %v1558, %v1576
        %v1589 = vadd.f32 %v1559, %v1576
        %v1590 = vadd.f32 %v1560, %v1576
        %v1591 = vadd.f32 %v1561, %v1576
        %v1592 = vadd.f32 %v1562, %v1576
        %v1593 = vadd.f32 %v1563, %v1576
        %v1594 = vadd.f32 %v1564, %v1576
        %v1595 = vadd.f32 %v1565, %v1576
        %v1596 = vadd.f32 %v1566, %v1576
        %v1597 = vadd.f32 %v1567, %v1576
        %v1598 = vadd.f32 %v1568, %v1576
        %v1599 = vadd.f32 %v1569, %v1576
        %v1600 = vadd.f32 %v1570, %v1576
        %v1601 = vadd.f32 %v1571, %v1576
        %v1602 = vadd.f32 %v1572, %v1576
        %v1603 = vadd.f32 %v1573, %v1576
        %v1604 = vmax.f32 %v1578, 0.0
        %v1605 = vmax.f32 %v1579, 0.0
        %v1606 = vmax.f32 %v1580, 0.0
        %v1607 = vmax.f32 %v1581, 0.0
        %v1608 = vmax.f32 %v1582, 0.0
        %v1609 = vmax.f32 %v1583, 0.0
        %v1610 = vmax.f32 %v1584, 0.0
        %v1611 = vmax.f32 %v1585, 0.0
        %v1612 = vmax.f32 %v1586, 0.0
        %v1613 = vmax.f32 %v1587, 0.0
        %v1614 = vmax.f32 %v1588, 0.0
        %v1615 = vmax.f32 %v1589, 0.0
        %v1616 = vmax.f32 %v1590, 0.0
        %v1617 = vmax.f32 %v1591, 0.0
        %v1618 = vmax.f32 %v1592, 0.0
        %v1619 = vmax.f32 %v1593, 0.0
        %v1620 = vmax.f32 %v1594, 0.0
        %v1621 = vmax.f32 %v1595, 0.0
        %v1622 = vmax.f32 %v1596, 0.0
        %v1623 = vmax.f32 %v1597, 0.0
        %v1624 = vmax.f32 %v1598, 0.0
        %v1625 = vmax.f32 %v1599, 0.0
        %v1626 = vmax.f32 %v1600, 0.0
        %v1627 = vmax.f32 %v1601, 0.0
        %v1628 = vmax.f32 %v1602, 0.0
        %v1629 = vmax.f32 %v1603, 0.0
        %vm1630 = vcmask 48128
        %1631 = vst.msk [vmem:[%s627] sm:$0xff] %vm1630, %v1604
        %1632 = vst.msk [vmem:[%s627 + $0x8] sm:$0xff] %vm1630, %v1605
        %1633 = vst.msk [vmem:[%s627 + $0x10] sm:$0xff] %vm1630, %v1606
        %1634 = vst.msk [vmem:[%s627 + $0x18] sm:$0xff] %vm1630, %v1607
        %1635 = vst.msk [vmem:[%s627 + $0x20] sm:$0xff] %vm1630, %v1608
        %1636 = vst.msk [vmem:[%s627 + $0x28] sm:$0xff] %vm1630, %v1609
        %1637 = vst.msk [vmem:[%s627 + $0x30] sm:$0xff] %vm1630, %v1610
        %1638 = vst.msk [vmem:[%s627 + $0x38] sm:$0xff] %vm1630, %v1611
        %1639 = vst.msk [vmem:[%s627 + $0x40] sm:$0xff] %vm1630, %v1612
        %1640 = vst.msk [vmem:[%s627 + $0x48] sm:$0xff] %vm1630, %v1613
        %1641 = vst.msk [vmem:[%s627 + $0x50] sm:$0xff] %vm1630, %v1614
        %1642 = vst.msk [vmem:[%s627 + $0x58] sm:$0xff] %vm1630, %v1615
        %1643 = vst.msk [vmem:[%s627 + $0x60] sm:$0xff] %vm1630, %v1616
        %1644 = vst.msk [vmem:[%s627 + $0x68] sm:$0xff] %vm1630, %v1617
        %1645 = vst.msk [vmem:[%s627 + $0x70] sm:$0xff] %vm1630, %v1618
        %1646 = vst.msk [vmem:[%s627 + $0x78] sm:$0xff] %vm1630, %v1619
        %1647 = vst.msk [vmem:[%s627 + $0x80] sm:$0xff] %vm1630, %v1620
        %1648 = vst.msk [vmem:[%s627 + $0x88] sm:$0xff] %vm1630, %v1621
        %1649 = vst.msk [vmem:[%s627 + $0x90] sm:$0xff] %vm1630, %v1622
        %1650 = vst.msk [vmem:[%s627 + $0x98] sm:$0xff] %vm1630, %v1623
        %1651 = vst.msk [vmem:[%s627 + $0xa0] sm:$0xff] %vm1630, %v1624
        %1652 = vst.msk [vmem:[%s627 + $0xa8] sm:$0xff] %vm1630, %v1625
        %1653 = vst.msk [vmem:[%s627 + $0xb0] sm:$0xff] %vm1630, %v1626
        %1654 = vst.msk [vmem:[%s627 + $0xb8] sm:$0xff] %vm1630, %v1627
        %1655 = vst.msk [vmem:[%s627 + $0xc0] sm:$0xff] %vm1630, %v1628
        %1656 = vst.msk [vmem:[%s627 + $0xc8] sm:$0xff] %vm1630, %v1629
        %s1657 = smul.u32 26, %s14
        %p1658 = scmp.lt.s32.totalorder %s1657, 51
        %s1659 = scalar_select %p1658, %s1657, 51
        %s1660 = smul.addr %s1659, 8
        %s1661 = scalar_lea.vmem %s3, %s1660
        // Predicated region
        $region74: #{net_forward.3} parent=68 // pred_check
          %p1662 = pneg %p100
        $region75: #{net_forward.3} parent=68 // pred_check_branch
          %1664 = sbr.rel (%p1662) target = $region77
        $region76: #{net_forward.3} parent=68 // pred_region
          %s1665 = smul.u32 26, %s14
        $region77: #{net_forward.3} parent=68 // pred_fallthru
          _
      $region69: #{net_forward.3} parent=5 // pred_fallthru
        _
      %p1666 = scmp.le.s32.totalorder 2, %s9
      // Predicated region
      $region78: #{net_forward.3} parent=5 // pred_check
        %p1667 = pneg %p1666
      $region79: #{net_forward.3} parent=5 // pred_check_branch
        %1669 = sbr.rel (%p1667) target = $region81
      $region80: #{net_forward.3} parent=5 // pred_region
        %s1670 = ssub.s32 %s9, 2
        // Predicated region
        $region82: #{net_forward.3} parent=80 // pred_check
          %p1671 = pneg %p106
        $region83: #{net_forward.3} parent=80 // pred_check_branch
          %1673 = sbr.rel (%p1671) target = $region85
        $region84: #{net_forward.3} parent=80 // pred_region
          %s1674 = smul.u32 26, %s15
          %p1675 = scmp.lt.s32.totalorder %s1674, 51
          %s1676 = scalar_select %p1675, %s1674, 51
          %s1677 = smul.addr %s1676, 8
          %s1678 = scalar_lea.vmem %s3, %s1677
        $region85: #{net_forward.3} parent=80 // pred_fallthru
          _
      $region81: #{net_forward.3} parent=5 // pred_fallthru
        _
    $region6: #{net_forward.3} parent=1 // loop_footer
      %s13 = sadd.s32 1, %s9
    $region7: #{net_forward.3} parent=1 // loop_footer_branch
      %8 = sbr.rel target = $region3
    $region8: #{net_forward.3} parent=1 // loop_exit
      _

// kernel: net_forward.4
$region0: #{net_forward.4}
  #allocation0 [shape = 'u32[]', space=smem, size = 0x4, offset = 0x4, fixed_abs, tag = 'smem constant byte address 0x4 - core index']
  #allocation1 [shape = 'u32[72,128]{1,0:T(1,128)}', space=vmem, size = 0x9000, scoped, tag = 'internal scratch']
  %s0 = inlined_call_operand.vmem [shape: bf16[4,64,150], index: 0, kind: input, shape index: {}]
  %s1 = inlined_call_operand.vmem [shape: bf16[150,16], index: 1, kind: input, shape index: {}]
  %s2 = inlined_call_operand.vmem [shape: f32[1,16], index: 2, kind: input, shape index: {}]
  %s3 = inlined_call_operand.vmem [shape: f32[64,16], index: 3, kind: output, shape index: {}]
  %s4 = sld [smem:[#allocation0]]
  $region83: #{net_forward.4} parent=0
    _
  %s6 = ssub.s32 1, %s4
  %s7 = scalar_select 0, %s6, %s4
  $region1: #{net_forward.4} parent=0
    #allocation2 [shape = 'u8[131072]{0}', space=vmem, size = 0x20000, scoped, tag = 'input window, operand 0']
    loop: start=0, step=1, limit=4
    $region2: #{net_forward.4} parent=1 // loop_pre_header
      _
    $region3: #{net_forward.4} parent=1 // loop_header
      %s9 = sphi 0, %s13
      %p10 = scmp.ge.s32.totalorder %s9, 4
      %s19 = sphi 0, %s21
      %s22 = sphi 0, %s19
      %s23 = sphi 0, %s22
      %s39 = sphi 0, %s23
      %s43 = sphi 0, %s43
      %s45 = sphi 0, %s43
      %s46 = sphi 0, %s45
      %s60 = sphi 0, %s46
      %s64 = sphi 0, %s64
      %s66 = sphi 0, %s64
      %s67 = sphi 0, %s66
      %s81 = sphi 0, %s67
      %s87 = sphi 0, %s89
      %s90 = sphi 0, %s87
      %s91 = sphi 0, %s90
      %s107 = sphi 0, %s91
    $region4: #{net_forward.4} parent=1 // loop_header_branch
      %12 = sbr.rel (%p10) target = $region8
    $region5: #{net_forward.4} parent=1 // loop_body
      %s14 = ssub.s32 %s9, 1
      %s15 = ssub.s32 %s9, 2
      %s16 = sadd.s32 %s9, 1
      %s17 = ssub.s32 %s9, %s16
      %p18 = scmp.eq.s32.totalorder %s17, 0
      %s20 = sadd.s32 %s19, 1
      %s21 = scalar_select %p18, %s19, %s20
      %p24 = pneg %p18
      %p25 = scmp.eq.s32.totalorder %s9, 1
      %p26 = por %p24, %p25
      %p27 = scmp.ne.s32.totalorder %s19, %s22
      %p28 = scmp.eq.s32.totalorder %s9, 0
      %p29 = por %p27, %p28
      %p30 = scmp.ne.s32.totalorder %s19, %s22
      %p31 = scmp.eq.s32.totalorder %s14, 1
      %p32 = por %p30, %p31
      %p33 = scmp.ne.s32.totalorder %s22, %s23
      %p34 = scmp.eq.s32.totalorder %s14, 0
      %p35 = por %p33, %p34
      %p36 = scmp.ne.s32.totalorder %s22, %s23
      %p37 = scmp.eq.s32.totalorder %s15, 1
      %p38 = por %p36, %p37
      %p40 = scmp.ne.s32.totalorder %s23, %s39
      %p41 = scmp.eq.s32.totalorder %s15, 0
      %p42 = por %p40, %p41
      %s44 = sadd.s32 %s43, 1
      %p47 = scmp.eq.s32.totalorder %s9, 1
      %p48 = scmp.ne.s32.totalorder %s43, %s45
      %p49 = scmp.eq.s32.totalorder %s9, 0
      %p50 = por %p48, %p49
      %p51 = scmp.ne.s32.totalorder %s43, %s45
      %p52 = scmp.eq.s32.totalorder %s14, 1
      %p53 = por %p51, %p52
      %p54 = scmp.ne.s32.totalorder %s45, %s46
      %p55 = scmp.eq.s32.totalorder %s14, 0
      %p56 = por %p54, %p55
      %p57 = scmp.ne.s32.totalorder %s45, %s46
      %p58 = scmp.eq.s32.totalorder %s15, 1
      %p59 = por %p57, %p58
      %p61 = scmp.ne.s32.totalorder %s46, %s60
      %p62 = scmp.eq.s32.totalorder %s15, 0
      %p63 = por %p61, %p62
      %s65 = sadd.s32 %s64, 1
      %p68 = scmp.eq.s32.totalorder %s9, 1
      %p69 = scmp.ne.s32.totalorder %s64, %s66
      %p70 = scmp.eq.s32.totalorder %s9, 0
      %p71 = por %p69, %p70
      %p72 = scmp.ne.s32.totalorder %s64, %s66
      %p73 = scmp.eq.s32.totalorder %s14, 1
      %p74 = por %p72, %p73
      %p75 = scmp.ne.s32.totalorder %s66, %s67
      %p76 = scmp.eq.s32.totalorder %s14, 0
      %p77 = por %p75, %p76
      %p78 = scmp.ne.s32.totalorder %s66, %s67
      %p79 = scmp.eq.s32.totalorder %s15, 1
      %p80 = por %p78, %p79
      %p82 = scmp.ne.s32.totalorder %s67, %s81
      %p83 = scmp.eq.s32.totalorder %s15, 0
      %p84 = por %p82, %p83
      %s85 = ssub.s32 %s9, %s16
      %p86 = scmp.eq.s32.totalorder %s85, 0
      %s88 = sadd.s32 %s87, 1
      %s89 = scalar_select %p86, %s87, %s88
      %p92 = pneg %p86
      %p93 = scmp.eq.s32.totalorder %s9, 1
      %p94 = por %p92, %p93
      %p95 = scmp.ne.s32.totalorder %s87, %s90
      %p96 = scmp.eq.s32.totalorder %s9, 0
      %p97 = por %p95, %p96
      %p98 = scmp.ne.s32.totalorder %s87, %s90
      %p99 = scmp.eq.s32.totalorder %s14, 1
      %p100 = por %p98, %p99
      %p101 = scmp.ne.s32.totalorder %s90, %s91
      %p102 = scmp.eq.s32.totalorder %s14, 0
      %p103 = por %p101, %p102
      %p104 = scmp.ne.s32.totalorder %s90, %s91
      %p105 = scmp.eq.s32.totalorder %s15, 1
      %p106 = por %p104, %p105
      %p108 = scmp.ne.s32.totalorder %s91, %s107
      %p109 = scmp.eq.s32.totalorder %s15, 0
      %p110 = por %p108, %p109
      %p111 = scmp.le.s32.totalorder 1, %s9
      %p112 = scmp.lt.s32.totalorder %s9, 3
      %p113 = pnand %p111, %p112
      %p114 = pneg %p113
      // Predicated region
      $region9: #{net_forward.4} parent=5 // pred_check
        _
      $region10: #{net_forward.4} parent=5 // pred_check_branch
        %116 = sbr.rel (%p113) target = $region12
      $region11: #{net_forward.4} parent=5 // pred_region
        %s117 = ssub.s32 %s9, 1
        // Predicated region
        $region13: #{net_forward.4} parent=11 // pred_check
          %p118 = pneg %p56
        $region14: #{net_forward.4} parent=11 // pred_check_branch
          %120 = sbr.rel (%p118) target = $region16
        $region15: #{net_forward.4} parent=11 // pred_region
          _
        $region16: #{net_forward.4} parent=11 // pred_fallthru
          _
        // Predicated region
        $region17: #{net_forward.4} parent=11 // pred_check
          %p121 = pneg %p77
        $region18: #{net_forward.4} parent=11 // pred_check_branch
          %123 = sbr.rel (%p121) target = $region20
        $region19: #{net_forward.4} parent=11 // pred_region
          _
        $region20: #{net_forward.4} parent=11 // pred_fallthru
          _
      $region12: #{net_forward.4} parent=5 // pred_fallthru
        _
      %p124 = scmp.lt.s32.totalorder %s9, 2
      // Predicated region
      $region21: #{net_forward.4} parent=5 // pred_check
        %p125 = pneg %p124
      $region22: #{net_forward.4} parent=5 // pred_check_branch
        %127 = sbr.rel (%p125) target = $region24
      $region23: #{net_forward.4} parent=5 // pred_region
        // Predicated region
        $region25: #{net_forward.4} parent=23 // pred_check
          %p128 = pneg %p29
        $region26: #{net_forward.4} parent=23 // pred_check_branch
          %130 = sbr.rel (%p128) target = $region28
        $region27: #{net_forward.4} parent=23 // pred_region
          %s131 = sand.u32 %s19, 1
          %s132 = sand.u32 %s19, 1
          %s133 = smul.addr %s132, 128
          %s134 = scalar_lea.vmem [#allocation2], %s133
          %s135 = smul.u32 4, %s9
          %s136 = smul.addr %s135, 2
          %s137 = smul.addr %s136, 4
          %s138 = scalar_lea.vmem %s0, %s137
          // Predicated region
          $region29: #{net_forward.4} parent=27 // pred_check
            _
          $region30: #{net_forward.4} parent=27 // pred_check_branch
            %140 = sbr.rel (0) target = $region32
          $region31: #{net_forward.4} parent=27 // pred_region
            // Predicated region
            $region33: #{net_forward.4} parent=31 // pred_check
              _
            $region34: #{net_forward.4} parent=31 // pred_check_branch
              %142 = sbr.rel (0) target = $region36
            $region35: #{net_forward.4} parent=31 // pred_region
              // Predicated region
              $region48: #{net_forward.4} parent=35 // pred_check
                _
              $region49: #{net_forward.4} parent=35 // pred_check_branch
                %188 = sbr.rel (0) target = $region51
              $region50: #{net_forward.4} parent=35 // pred_region
                loop: start=0, step=1, limit=1
                $region52: #{net_forward.4} parent=50 // loop_pre_header
                  _
                $region53: #{net_forward.4} parent=50 // loop_header
                  %s190 = sphi 0, %s194
                  %p191 = scmp.ge.s32.totalorder %s190, 1
                  %s195 = sphi %s138, %s138
                  %s196 = sphi %s134, %s134
                $region54: #{net_forward.4} parent=50 // loop_header_branch
                  %193 = sbr.rel (%p191) target = $region58
                $region55: #{net_forward.4} parent=50 // loop_body
                  %v197 = vld [vmem:[%s195] sm:$0xff]
                  %198 = vst [vmem:[%s196] sm:$0xff] %v197
                  %v199 = vld [vmem:[%s195 + $0x8] sm:$0xff]
                  %200 = vst [vmem:[%s196 + $0x8] sm:$0xff] %v199
                  %v201 = vld [vmem:[%s195 + $0x10] sm:$0xff]
                  %202 = vst [vmem:[%s196 + $0x10] sm:$0xff] %v201
                  %v203 = vld [vmem:[%s195 + $0x18] sm:$0xff]
                  %204 = vst [vmem:[%s196 + $0x18] sm:$0xff] %v203
                  %v205 = vld [vmem:[%s195 + $0x40] sm:$0xff]
                  %206 = vst [vmem:[%s196 + $0x20] sm:$0xff] %v205
                  %v207 = vld [vmem:[%s195 + $0x48] sm:$0xff]
                  %208 = vst [vmem:[%s196 + $0x28] sm:$0xff] %v207
                  %v209 = vld [vmem:[%s195 + $0x50] sm:$0xff]
                  %210 = vst [vmem:[%s196 + $0x30] sm:$0xff] %v209
                  %v211 = vld [vmem:[%s195 + $0x58] sm:$0xff]
                  %212 = vst [vmem:[%s196 + $0x38] sm:$0xff] %v211
                  %v213 = vld [vmem:[%s195 + $0x80] sm:$0xff]
                  %214 = vst [vmem:[%s196 + $0x40] sm:$0xff] %v213
                  %v215 = vld [vmem:[%s195 + $0x88] sm:$0xff]
                  %216 = vst [vmem:[%s196 + $0x48] sm:$0xff] %v215
                  %v217 = vld [vmem:[%s195 + $0x90] sm:$0xff]
                  %218 = vst [vmem:[%s196 + $0x50] sm:$0xff] %v217
                  %v219 = vld [vmem:[%s195 + $0x98] sm:$0xff]
                  %220 = vst [vmem:[%s196 + $0x58] sm:$0xff] %v219
                  %v221 = vld [vmem:[%s195 + $0xc0] sm:$0xff]
                  %222 = vst [vmem:[%s196 + $0x60] sm:$0xff] %v221
                  %v223 = vld [vmem:[%s195 + $0xc8] sm:$0xff]
                  %224 = vst [vmem:[%s196 + $0x68] sm:$0xff] %v223
                  %v225 = vld [vmem:[%s195 + $0xd0] sm:$0xff]
                  %226 = vst [vmem:[%s196 + $0x70] sm:$0xff] %v225
                  %v227 = vld [vmem:[%s195 + $0xd8] sm:$0xff]
                  %228 = vst [vmem:[%s196 + $0x78] sm:$0xff] %v227
                $region56: #{net_forward.4} parent=50 // loop_footer
                  %s194 = sadd.s32 1, %s190
                $region57: #{net_forward.4} parent=50 // loop_footer_branch
                  %189 = sbr.rel target = $region53
                $region58: #{net_forward.4} parent=50 // loop_exit
                  _
              $region51: #{net_forward.4} parent=35 // pred_fallthru
                _
              // Predicated region
              $region59: #{net_forward.4} parent=35 // pred_check
                _
              $region60: #{net_forward.4} parent=35 // pred_check_branch
                %230 = sbr.rel target = $region62
              $region61: #{net_forward.4} parent=35 // pred_region
                _
              $region62: #{net_forward.4} parent=35 // pred_fallthru
                _
            $region36: #{net_forward.4} parent=31 // pred_fallthru
              _
            // Predicated region
            $region37: #{net_forward.4} parent=31 // pred_check
              _
            $region38: #{net_forward.4} parent=31 // pred_check_branch
              %144 = sbr.rel target = $region40
            $region39: #{net_forward.4} parent=31 // pred_region
              %s146 = ssub.s32 256, 1
              loop: start=0, step=1, limit=1
              $region41: #{net_forward.4} parent=39 // loop_pre_header
                _
              $region42: #{net_forward.4} parent=39 // loop_header
                %s148 = sphi 0, %s152
                %p149 = scmp.ge.s32.totalorder %s148, 1
                %s153 = sphi %s138, %s138
                %s154 = sphi %s134, %s134
              $region43: #{net_forward.4} parent=39 // loop_header_branch
                %151 = sbr.rel (%p149) target = $region47
              $region44: #{net_forward.4} parent=39 // loop_body
                %v155 = vld [vmem:[%s153] sm:%s146]
                %156 = vst [vmem:[%s154] sm:%s146] %v155
                %v157 = vld [vmem:[%s153 + $0x8] sm:%s146]
                %158 = vst [vmem:[%s154 + $0x8] sm:%s146] %v157
                %v159 = vld [vmem:[%s153 + $0x10] sm:%s146]
                %160 = vst [vmem:[%s154 + $0x10] sm:%s146] %v159
                %v161 = vld [vmem:[%s153 + $0x18] sm:%s146]
                %162 = vst [vmem:[%s154 + $0x18] sm:%s146] %v161
                %v163 = vld [vmem:[%s153 + $0x40] sm:%s146]
                %164 = vst [vmem:[%s154 + $0x20] sm:%s146] %v163
                %v165 = vld [vmem:[%s153 + $0x48] sm:%s146]
                %166 = vst [vmem:[%s154 + $0x28] sm:%s146] %v165
                %v167 = vld [vmem:[%s153 + $0x50] sm:%s146]
                %168 = vst [vmem:[%s154 + $0x30] sm:%s146] %v167
                %v169 = vld [vmem:[%s153 + $0x58] sm:%s146]
                %170 = vst [vmem:[%s154 + $0x38] sm:%s146] %v169
                %v171 = vld [vmem:[%s153 + $0x80] sm:%s146]
                %172 = vst [vmem:[%s154 + $0x40] sm:%s146] %v171
                %v173 = vld [vmem:[%s153 + $0x88] sm:%s146]
                %174 = vst [vmem:[%s154 + $0x48] sm:%s146] %v173
                %v175 = vld [vmem:[%s153 + $0x90] sm:%s146]
                %176 = vst [vmem:[%s154 + $0x50] sm:%s146] %v175
                %v177 = vld [vmem:[%s153 + $0x98] sm:%s146]
                %178 = vst [vmem:[%s154 + $0x58] sm:%s146] %v177
                %v179 = vld [vmem:[%s153 + $0xc0] sm:%s146]
                %180 = vst [vmem:[%s154 + $0x60] sm:%s146] %v179
                %v181 = vld [vmem:[%s153 + $0xc8] sm:%s146]
                %182 = vst [vmem:[%s154 + $0x68] sm:%s146] %v181
                %v183 = vld [vmem:[%s153 + $0xd0] sm:%s146]
                %184 = vst [vmem:[%s154 + $0x70] sm:%s146] %v183
                %v185 = vld [vmem:[%s153 + $0xd8] sm:%s146]
                %186 = vst [vmem:[%s154 + $0x78] sm:%s146] %v185
              $region45: #{net_forward.4} parent=39 // loop_footer
                %s152 = sadd.s32 1, %s148
              $region46: #{net_forward.4} parent=39 // loop_footer_branch
                %147 = sbr.rel target = $region42
              $region47: #{net_forward.4} parent=39 // loop_exit
                _
            $region40: #{net_forward.4} parent=31 // pred_fallthru
              _
          $region32: #{net_forward.4} parent=27 // pred_fallthru
            _
          %231 = vnop
        $region28: #{net_forward.4} parent=23 // pred_fallthru
          _
      $region24: #{net_forward.4} parent=5 // pred_fallthru
        _
      %p232 = scmp.le.s32.totalorder 1, %s9
      %p233 = scmp.lt.s32.totalorder %s9, 3
      %p234 = pnand %p232, %p233
      %p235 = pneg %p234
      // Predicated region
      $region63: #{net_forward.4} parent=5 // pred_check
        _
      $region64: #{net_forward.4} parent=5 // pred_check_branch
        %237 = sbr.rel (%p234) target = $region66
      $region65: #{net_forward.4} parent=5 // pred_region
        %s238 = ssub.s32 %s9, 1
        %s239 = sand.u32 %s22, 1
        %s240 = sand.u32 %s22, 1
        %s241 = smul.addr %s240, 128
        %s242 = scalar_lea.vmem [#allocation2], %s241
        // Predicated region
        $region67: #{net_forward.4} parent=65 // pred_check
          %p243 = pneg %p35
        $region68: #{net_forward.4} parent=65 // pred_check_branch
          %245 = sbr.rel (%p243) target = $region70
        $region69: #{net_forward.4} parent=65 // pred_region
          _
        $region70: #{net_forward.4} parent=65 // pred_fallthru
          _
        %s246 = sand.u32 %s22, 1
        %s247 = sand.u32 %s22, 1
        %s248 = smul.addr %s247, 128
        %s249 = scalar_lea.vmem [#allocation2], %s248
        %p250 = pneg %p35
        %p251 = pneg %p32
        %p252 = pneg %p56
        %p253 = pneg %p53
        %p254 = pneg %p77
        %p255 = pneg %p74
        %p256 = pneg %p103
        %p257 = pneg %p100
        %s258 = smul.u32 4, %s14
        %p259 = scmp.lt.s32.totalorder %s258, 7
        %s260 = scalar_select %p259, %s258, 7
        %s261 = smul.addr %s260, 8
        %s262 = scalar_lea.vmem %s3, %s261
        %s263 = smul.u32 4, %s14
        %s264 = smul.u32 4, %s14
        %p265 = scmp.lt.s32.totalorder %s264, 7
        %s266 = scalar_select %p265, %s264, 7
        %s267 = smul.addr %s266, 8
        %s268 = scalar_lea.vmem %s3, %s267
        %s269 = smul.u32 4, %s14
        %v271 = vld [vmem:[%s1] sm:$0xf]
        %v272 = vld [vmem:[%s1 + $0x4] sm:$0xf]
        %v273 = vld [vmem:[%s1 + $0x8] sm:$0xf]
        %v274 = vld [vmem:[%s1 + $0xc] sm:$0xf]
        %v275 = vld [vmem:[%s1 + $0x10] sm:$0xf]
        %v276 = vld [vmem:[%s1 + $0x14] sm:$0xf]
        %v277 = vld [vmem:[%s1 + $0x18] sm:$0xf]
        %v278 = vld [vmem:[%s1 + $0x1c] sm:$0xf]
        %v279 = vld [vmem:[%s1 + $0x20] sm:$0xf]
        %v280 = vld [vmem:[%s1 + $0x24] sm:$0xf]
        %v281 = vld [vmem:[%s1 + $0x28] sm:$0xf]
        %v282 = vld [vmem:[%s1 + $0x2c] sm:$0xf]
        %v283 = vld [vmem:[%s1 + $0x30] sm:$0xf]
        %v284 = vld [vmem:[%s1 + $0x34] sm:$0xf]
        %v285 = vld [vmem:[%s1 + $0x38] sm:$0xf]
        %v286 = vld [vmem:[%s1 + $0x3c] sm:$0xf]
        %v287 = vld [vmem:[%s1 + $0x40] sm:$0xf]
        %v288 = vld [vmem:[%s1 + $0x44] sm:$0xf]
        %v289 = vld [vmem:[%s1 + $0x48] sm:$0x7]
        %v290 = vld [vmem:[%s242] sm:$0xff]
        %v291 = vld [vmem:[%s242 + $0x8] sm:$0xff]
        %v292 = vld [vmem:[%s242 + $0x10] sm:$0xff]
        %v293 = vld [vmem:[%s242 + $0x18] sm:$0xff]
        %v298 = vunpack.c.l.b16 %v290
        %v299 = vunpack.c.h.b16 %v290
        %v300 = vunpack.c.l.b16 %v291
        %v301 = vunpack.c.h.b16 %v291
        %v302 = vunpack.c.l.b16 %v292
        %v303 = vunpack.c.h.b16 %v292
        %v304 = vunpack.c.l.b16 %v293
        %v305 = vunpack.c.h.b16 %v293
        %v306 = vpack.c.b16 %v300, %v298
        %v307 = vpack.c.b16 %v301, %v299
        %v308 = vpack.c.b16 %v304, %v302
        %v309 = vpack.c.b16 %v305, %v303
        %v331 = vunpack.c.l.b16 %v271
        %v332 = vunpack.c.l.b16 %v272
        %v333 = vunpack.c.l.b16 %v273
        %v334 = vunpack.c.l.b16 %v274
        %v335 = vunpack.c.l.b16 %v275
        %v336 = vunpack.c.l.b16 %v276
        %v337 = vunpack.c.l.b16 %v277
        %v338 = vunpack.c.l.b16 %v278
        %v339 = vunpack.c.l.b16 %v279
        %v340 = vunpack.c.l.b16 %v280
        %v341 = vunpack.c.l.b16 %v281
        %v342 = vunpack.c.l.b16 %v282
        %v343 = vunpack.c.l.b16 %v283
        %v344 = vunpack.c.l.b16 %v284
        %v345 = vunpack.c.l.b16 %v285
        %v346 = vunpack.c.l.b16 %v286
        %v347 = vunpack.c.l.b16 %v287
        %v348 = vunpack.c.l.b16 %v288
        %v349 = vunpack.c.l.b16 %v289
        %v350 = vpack.c.b16 %v332, %v331
        %v351 = vpack.c.b16 %v334, %v333
        %v352 = vpack.c.b16 %v336, %v335
        %v353 = vpack.c.b16 %v338, %v337
        %v354 = vpack.c.b16 %v340, %v339
        %v355 = vpack.c.b16 %v342, %v341
        %v356 = vpack.c.b16 %v344, %v343
        %v357 = vpack.c.b16 %v346, %v345
        %v358 = vpack.c.b16 %v348, %v347
        %v359 = vpack.c.b16 %v349, %v349
        %vm369 = vcmask 179200
        %v371 = vsel %vm369, %v307, 0
        %v374 = vsel %vm369, %v309, 0
        %vm376 = vcmask 1042432
        %v378 = vsel %vm376, %v359, 0
        %380 = vmatpush.bf16.msra.mxu0 %v357
        %381 = vmatpush.bf16.msra.mxu0 %v356
        %382 = vmatpush.bf16.msra.mxu0 %v355
        %383 = vmatpush.bf16.msra.mxu0 %v354
        %384 = vmatpush.bf16.msra.mxu0 %v353
        %385 = vmatpush.bf16.msra.mxu0 %v352
        %386 = vmatpush.bf16.msra.mxu0 %v351
        %387 = vmatpush.bf16.msra.mxu0 %v350
        %388 = vmatmul.bf16.gmra.mxu0 %v306
        %v389 = vpop.f32.mrf.mxu0
        %v390 = vadd.f32 0.0, %v389
        %v391 = vpop.f32.mrf.mxu0
        %v392 = vadd.f32 0.0, %v391
        %393 = vmatmul.bf16.gmra.mxu0 %v308
        %v394 = vpop.f32.mrf.mxu0
        %v395 = vadd.f32 0.0, %v394
        %v396 = vpop.f32.mrf.mxu0
        %v397 = vadd.f32 0.0, %v396
        %398 = vdwg.mxu0
        %399 = vmatpush.bf16.msra.mxu0 0
        %400 = vmatpush.bf16.msra.mxu0 0
        %401 = vmatpush.bf16.msra.mxu0 0
        %402 = vmatpush.bf16.msra.mxu0 0
        %403 = vmatpush.bf16.msra.mxu0 0
        %404 = vmatpush.bf16.msra.mxu0 0
        %405 = vmatpush.bf16.msra.mxu0 %v378
        %406 = vmatpush.bf16.msra.mxu0 %v358
        %407 = vmatmul.bf16.gmra.mxu0 %v371
        %v408 = vpop.f32.mrf.mxu0
        %v409 = vadd.f32 %v390, %v408
        %v410 = vpop.f32.mrf.mxu0
        %v411 = vadd.f32 %v392, %v410
        %412 = vmatmul.bf16.gmra.mxu0 %v374
        %v413 = vpop.f32.mrf.mxu0
        %v414 = vadd.f32 %v395, %v413
        %v415 = vpop.f32.mrf.mxu0
        %v416 = vadd.f32 %v397, %v415
        %417 = vdwg.mxu0
        %s418 = scalar_lea.vmem %s242, 32 [#allocation2]
        %v419 = vld [vmem:[%s418] sm:$0xff]
        %v420 = vld [vmem:[%s418 + $0x8] sm:$0xff]
        %v421 = vld [vmem:[%s418 + $0x10] sm:$0xff]
        %v422 = vld [vmem:[%s418 + $0x18] sm:$0xff]
        %v427 = vunpack.c.l.b16 %v419
        %v428 = vunpack.c.h.b16 %v419
        %v429 = vunpack.c.l.b16 %v420
        %v430 = vunpack.c.h.b16 %v420
        %v431 = vunpack.c.l.b16 %v421
        %v432 = vunpack.c.h.b16 %v421
        %v433 = vunpack.c.l.b16 %v422
        %v434 = vunpack.c.h.b16 %v422
        %v435 = vpack.c.b16 %v429, %v427
        %v436 = vpack.c.b16 %v430, %v428
        %v437 = vpack.c.b16 %v433, %v431
        %v438 = vpack.c.b16 %v434, %v432
        %v442 = vsel %vm369, %v436, 0
        %v445 = vsel %vm369, %v438, 0
        %447 = vmatpush.bf16.msra.mxu0 %v357
        %448 = vmatpush.bf16.msra.mxu0 %v356
        %449 = vmatpush.bf16.msra.mxu0 %v355
        %450 = vmatpush.bf16.msra.mxu0 %v354
        %451 = vmatpush.bf16.msra.mxu0 %v353
        %452 = vmatpush.bf16.msra.mxu0 %v352
        %453 = vmatpush.bf16.msra.mxu0 %v351
        %454 = vmatpush.bf16.msra.mxu0 %v350
        %455 = vmatmul.bf16.gmra.mxu0 %v435
        %v456 = vpop.f32.mrf.mxu0
        %v457 = vadd.f32 0.0, %v456
        %v458 = vpop.f32.mrf.mxu0
        %v459 = vadd.f32 0.0, %v458
        %460 = vmatmul.bf16.gmra.mxu0 %v437
        %v461 = vpop.f32.mrf.mxu0
        %v462 = vadd.f32 0.0, %v461
        %v463 = vpop.f32.mrf.mxu0
        %v464 = vadd.f32 0.0, %v463
        %465 = vdwg.mxu0
        %466 = vmatpush.bf16.msra.mxu0 0
        %467 = vmatpush.bf16.msra.mxu0 0
        %468 = vmatpush.bf16.msra.mxu0 0
        %469 = vmatpush.bf16.msra.mxu0 0
        %470 = vmatpush.bf16.msra.mxu0 0
        %471 = vmatpush.bf16.msra.mxu0 0
        %472 = vmatpush.bf16.msra.mxu0 %v378
        %473 = vmatpush.bf16.msra.mxu0 %v358
        %474 = vmatmul.bf16.gmra.mxu0 %v442
        %v475 = vpop.f32.mrf.mxu0
        %v476 = vadd.f32 %v457, %v475
        %v477 = vpop.f32.mrf.mxu0
        %v478 = vadd.f32 %v459, %v477
        %479 = vmatmul.bf16.gmra.mxu0 %v445
        %v480 = vpop.f32.mrf.mxu0
        %v481 = vadd.f32 %v462, %v480
        %v482 = vpop.f32.mrf.mxu0
        %v483 = vadd.f32 %v464, %v482
        %484 = vdwg.mxu0
        %v485 = vmax.f32 %v409, %v476
        %v486 = vmax.f32 %v411, %v478
        %v487 = vmax.f32 %v414, %v481
        %v488 = vmax.f32 %v416, %v483
        %s489 = scalar_lea.vmem %s242, 64 [#allocation2]
        %v490 = vld [vmem:[%s489] sm:$0xff]
        %v491 = vld [vmem:[%s489 + $0x8] sm:$0xff]
        %v492 = vld [vmem:[%s489 + $0x10] sm:$0xff]
        %v493 = vld [vmem:[%s489 + $0x18] sm:$0xff]
        %v498 = vunpack.c.l.b16 %v490
        %v499 = vunpack.c.h.b16 %v490
        %v500 = vunpack.c.l.b16 %v491
        %v501 = vunpack.c.h.b16 %v491
        %v502 = vunpack.c.l.b16 %v492
        %v503 = vunpack.c.h.b16 %v492
        %v504 = vunpack.c.l.b16 %v493
        %v505 = vunpack.c.h.b16 %v493
        %v506 = vpack.c.b16 %v500, %v498
        %v507 = vpack.c.b16 %v501, %v499
        %v508 = vpack.c.b16 %v504, %v502
        %v509 = vpack.c.b16 %v505, %v503
        %v513 = vsel %vm369, %v507, 0
        %v516 = vsel %vm369, %v509, 0
        %518 = vmatpush.bf16.msra.mxu0 %v357
        %519 = vmatpush.bf16.msra.mxu0 %v356
        %520 = vmatpush.bf16.msra.mxu0 %v355
        %521 = vmatpush.bf16.msra.mxu0 %v354
        %522 = vmatpush.bf16.msra.mxu0 %v353
        %523 = vmatpush.bf16.msra.mxu0 %v352
        %524 = vmatpush.bf16.msra.mxu0 %v351
        %525 = vmatpush.bf16.msra.mxu0 %v350
        %526 = vmatmul.bf16.gmra.mxu0 %v506
        %v527 = vpop.f32.mrf.mxu0
        %v528 = vadd.f32 0.0, %v527
        %v529 = vpop.f32.mrf.mxu0
        %v530 = vadd.f32 0.0, %v529
        %531 = vmatmul.bf16.gmra.mxu0 %v508
        %v532 = vpop.f32.mrf.mxu0
        %v533 = vadd.f32 0.0, %v532
        %v534 = vpop.f32.mrf.mxu0
        %v535 = vadd.f32 0.0, %v534
        %536 = vdwg.mxu0
        %537 = vmatpush.bf16.msra.mxu0 0
        %538 = vmatpush.bf16.msra.mxu0 0
        %539 = vmatpush.bf16.msra.mxu0 0
        %540 = vmatpush.bf16.msra.mxu0 0
        %541 = vmatpush.bf16.msra.mxu0 0
        %542 = vmatpush.bf16.msra.mxu0 0
        %543 = vmatpush.bf16.msra.mxu0 %v378
        %544 = vmatpush.bf16.msra.mxu0 %v358
        %545 = vmatmul.bf16.gmra.mxu0 %v513
        %v546 = vpop.f32.mrf.mxu0
        %v547 = vadd.f32 %v528, %v546
        %v548 = vpop.f32.mrf.mxu0
        %v549 = vadd.f32 %v530, %v548
        %550 = vmatmul.bf16.gmra.mxu0 %v516
        %v551 = vpop.f32.mrf.mxu0
        %v552 = vadd.f32 %v533, %v551
        %v553 = vpop.f32.mrf.mxu0
        %v554 = vadd.f32 %v535, %v553
        %555 = vdwg.mxu0
        %v556 = vmax.f32 %v485, %v547
        %v557 = vmax.f32 %v486, %v549
        %v558 = vmax.f32 %v487, %v552
        %v559 = vmax.f32 %v488, %v554
        %s560 = scalar_lea.vmem %s242, 96 [#allocation2]
        %v561 = vld [vmem:[%s560] sm:$0xff]
        %v562 = vld [vmem:[%s560 + $0x8] sm:$0xff]
        %v563 = vld [vmem:[%s560 + $0x10] sm:$0xff]
        %v564 = vld [vmem:[%s560 + $0x18] sm:$0xff]
        %v569 = vunpack.c.l.b16 %v561
        %v570 = vunpack.c.h.b16 %v561
        %v571 = vunpack.c.l.b16 %v562
        %v572 = vunpack.c.h.b16 %v562
        %v573 = vunpack.c.l.b16 %v563
        %v574 = vunpack.c.h.b16 %v563
        %v575 = vunpack.c.l.b16 %v564
        %v576 = vunpack.c.h.b16 %v564
        %v577 = vpack.c.b16 %v571, %v569
        %v578 = vpack.c.b16 %v572, %v570
        %v579 = vpack.c.b16 %v575, %v573
        %v580 = vpack.c.b16 %v576, %v574
        %v584 = vsel %vm369, %v578, 0
        %v587 = vsel %vm369, %v580, 0
        %589 = vmatpush.bf16.msra.mxu0 %v357
        %590 = vmatpush.bf16.msra.mxu0 %v356
        %591 = vmatpush.bf16.msra.mxu0 %v355
        %592 = vmatpush.bf16.msra.mxu0 %v354
        %593 = vmatpush.bf16.msra.mxu0 %v353
        %594 = vmatpush.bf16.msra.mxu0 %v352
        %595 = vmatpush.bf16.msra.mxu0 %v351
        %596 = vmatpush.bf16.msra.mxu0 %v350
        %597 = vmatmul.bf16.gmra.mxu0 %v577
        %v598 = vpop.f32.mrf.mxu0
        %v599 = vadd.f32 0.0, %v598
        %v600 = vpop.f32.mrf.mxu0
        %v601 = vadd.f32 0.0, %v600
        %602 = vmatmul.bf16.gmra.mxu0 %v579
        %v603 = vpop.f32.mrf.mxu0
        %v604 = vadd.f32 0.0, %v603
        %v605 = vpop.f32.mrf.mxu0
        %v606 = vadd.f32 0.0, %v605
        %607 = vdwg.mxu0
        %608 = vmatpush.bf16.msra.mxu0 0
        %609 = vmatpush.bf16.msra.mxu0 0
        %610 = vmatpush.bf16.msra.mxu0 0
        %611 = vmatpush.bf16.msra.mxu0 0
        %612 = vmatpush.bf16.msra.mxu0 0
        %613 = vmatpush.bf16.msra.mxu0 0
        %614 = vmatpush.bf16.msra.mxu0 %v378
        %615 = vmatpush.bf16.msra.mxu0 %v358
        %616 = vmatmul.bf16.gmra.mxu0 %v584
        %v617 = vpop.f32.mrf.mxu0
        %v618 = vadd.f32 %v599, %v617
        %v619 = vpop.f32.mrf.mxu0
        %v620 = vadd.f32 %v601, %v619
        %621 = vmatmul.bf16.gmra.mxu0 %v587
        %v622 = vpop.f32.mrf.mxu0
        %v623 = vadd.f32 %v604, %v622
        %v624 = vpop.f32.mrf.mxu0
        %v625 = vadd.f32 %v606, %v624
        %626 = vdwg.mxu0
        %v627 = vmax.f32 %v556, %v618
        %v628 = vmax.f32 %v557, %v620
        %v629 = vmax.f32 %v558, %v623
        %v630 = vmax.f32 %v559, %v625
        %v631 = vld [vmem:[%s2] sm:$0x1]
        %v633 = vperm.slane %v631, 0
        %v635 = vadd.f32 %v627, %v633
        %v636 = vadd.f32 %v628, %v633
        %v637 = vadd.f32 %v629, %v633
        %v638 = vadd.f32 %v630, %v633
        %v639 = vmax.f32 %v635, 0.0
        %v640 = vmax.f32 %v636, 0.0
        %v641 = vmax.f32 %v637, 0.0
        %v642 = vmax.f32 %v638, 0.0
        %vm643 = vcmask 130048
        %644 = vst.msk [vmem:[%s268] sm:$0xff] %vm643, %v639
        %645 = vst.msk [vmem:[%s268 + $0x8] sm:$0xff] %vm643, %v640
        %646 = vst.msk [vmem:[%s268 + $0x10] sm:$0xff] %vm643, %v641
        %647 = vst.msk [vmem:[%s268 + $0x18] sm:$0xff] %vm643, %v642
        %s648 = smul.u32 4, %s14
        %p649 = scmp.lt.s32.totalorder %s648, 7
        %s650 = scalar_select %p649, %s648, 7
        %s651 = smul.addr %s650, 8
        %s652 = scalar_lea.vmem %s3, %s651
        // Predicated region
        $region71: #{net_forward.4} parent=65 // pred_check
          %p653 = pneg %p100
        $region72: #{net_forward.4} parent=65 // pred_check_branch
          %655 = sbr.rel (%p653) target = $region74
        $region73: #{net_forward.4} parent=65 // pred_region
          %s656 = smul.u32 4, %s14
        $region74: #{net_forward.4} parent=65 // pred_fallthru
          _
      $region66: #{net_forward.4} parent=5 // pred_fallthru
        _
      %p657 = scmp.le.s32.totalorder 2, %s9
      // Predicated region
      $region75: #{net_forward.4} parent=5 // pred_check
        %p658 = pneg %p657
      $region76: #{net_forward.4} parent=5 // pred_check_branch
        %660 = sbr.rel (%p658) target = $region78
      $region77: #{net_forward.4} parent=5 // pred_region
        %s661 = ssub.s32 %s9, 2
        // Predicated region
        $region79: #{net_forward.4} parent=77 // pred_check
          %p662 = pneg %p106
        $region80: #{net_forward.4} parent=77 // pred_check_branch
          %664 = sbr.rel (%p662) target = $region82
        $region81: #{net_forward.4} parent=77 // pred_region
          %s665 = smul.u32 4, %s15
          %p666 = scmp.lt.s32.totalorder %s665, 7
          %s667 = scalar_select %p666, %s665, 7
          %s668 = smul.addr %s667, 8
          %s669 = scalar_lea.vmem %s3, %s668
        $region82: #{net_forward.4} parent=77 // pred_fallthru
          _
      $region78: #{net_forward.4} parent=5 // pred_fallthru
        _
    $region6: #{net_forward.4} parent=1 // loop_footer
      %s13 = sadd.s32 1, %s9
    $region7: #{net_forward.4} parent=1 // loop_footer_branch
      %8 = sbr.rel target = $region3
    $region8: #{net_forward.4} parent=1 // loop_exit
      _

// kernel: net_forward.5
$region0: #{net_forward.5}
  #allocation0 [shape = 'u32[]', space=smem, size = 0x4, offset = 0x4, fixed_abs, tag = 'smem constant byte address 0x4 - core index']
  #allocation1 [shape = 'u32[72,128]{1,0:T(1,128)}', space=vmem, size = 0x9000, scoped, tag = 'internal scratch']
  %s0 = inlined_call_operand.vmem [shape: f32[8,400], index: 0, kind: input, shape index: {}]
  %s1 = inlined_call_operand.vmem [shape: f32[400,120], index: 1, kind: input, shape index: {}]
  %s2 = inlined_call_operand.vmem [shape: f32[1,120], index: 2, kind: input, shape index: {}]
  %s3 = inlined_call_operand.vmem [shape: f32[120,84], index: 3, kind: input, shape index: {}]
  %s4 = inlined_call_operand.vmem [shape: f32[1,84], index: 4, kind: input, shape index: {}]
  %s5 = inlined_call_operand.vmem [shape: f32[84,128], index: 5, kind: input, shape index: {}]
  %s6 = inlined_call_operand.vmem [shape: f32[1,128], index: 6, kind: input, shape index: {}]
  %s7 = inlined_call_operand.vmem [shape: f32[8,128], index: 7, kind: output, shape index: {}]
  %s8 = sld [smem:[#allocation0]]
  $region38: #{net_forward.5} parent=0
    _
  %s10 = ssub.s32 1, %s8
  %s11 = scalar_select 0, %s10, %s8
  // Predicated region
  $region2: #{net_forward.5} parent=0 // pred_check
    _
  $region3: #{net_forward.5} parent=0 // pred_check_branch
    %13 = sbr.rel (0) target = $region5
  $region4: #{net_forward.5} parent=0 // pred_region
    _
  $region5: #{net_forward.5} parent=0 // pred_fallthru
    _
  // Predicated region
  $region6: #{net_forward.5} parent=0 // pred_check
    _
  $region7: #{net_forward.5} parent=0 // pred_check_branch
    %15 = sbr.rel (0) target = $region9
  $region8: #{net_forward.5} parent=0 // pred_region
    _
  $region9: #{net_forward.5} parent=0 // pred_fallthru
    _
  // Predicated region
  $region10: #{net_forward.5} parent=0 // pred_check
    _
  $region11: #{net_forward.5} parent=0 // pred_check_branch
    %17 = sbr.rel (0) target = $region13
  $region12: #{net_forward.5} parent=0 // pred_region
    _
  $region13: #{net_forward.5} parent=0 // pred_fallthru
    _
  // Predicated region
  $region14: #{net_forward.5} parent=0 // pred_check
    _
  $region15: #{net_forward.5} parent=0 // pred_check_branch
    %19 = sbr.rel (0) target = $region17
  $region16: #{net_forward.5} parent=0 // pred_region
    _
  $region17: #{net_forward.5} parent=0 // pred_fallthru
    _
  // Predicated region
  $region18: #{net_forward.5} parent=0 // pred_check
    _
  $region19: #{net_forward.5} parent=0 // pred_check_branch
    %21 = sbr.rel (0) target = $region21
  $region20: #{net_forward.5} parent=0 // pred_region
    _
  $region21: #{net_forward.5} parent=0 // pred_fallthru
    _
  // Predicated region
  $region22: #{net_forward.5} parent=0 // pred_check
    _
  $region23: #{net_forward.5} parent=0 // pred_check_branch
    %23 = sbr.rel (0) target = $region25
  $region24: #{net_forward.5} parent=0 // pred_region
    _
  $region25: #{net_forward.5} parent=0 // pred_fallthru
    _
  // Predicated region
  $region26: #{net_forward.5} parent=0 // pred_check
    _
  $region27: #{net_forward.5} parent=0 // pred_check_branch
    %25 = sbr.rel (0) target = $region29
  $region28: #{net_forward.5} parent=0 // pred_region
    _
  $region29: #{net_forward.5} parent=0 // pred_fallthru
    _
  %v26 = vld [vmem:[%s0] sm:$0xff]
  %v27 = vld [vmem:[%s0 + $0x8] sm:$0xff]
  %v28 = vld [vmem:[%s0 + $0x10] sm:$0xff]
  %v29 = vld [vmem:[%s0 + $0x18] sm:$0xff]
  %v30 = vld [vmem:[%s1] sm:$0xff]
  %v31 = vld [vmem:[%s1 + $0x8] sm:$0xff]
  %v32 = vld [vmem:[%s1 + $0x10] sm:$0xff]
  %v33 = vld [vmem:[%s1 + $0x18] sm:$0xff]
  %v34 = vld [vmem:[%s1 + $0x20] sm:$0xff]
  %v35 = vld [vmem:[%s1 + $0x28] sm:$0xff]
  %v36 = vld [vmem:[%s1 + $0x30] sm:$0xff]
  %v37 = vld [vmem:[%s1 + $0x38] sm:$0xff]
  %v38 = vld [vmem:[%s1 + $0x40] sm:$0xff]
  %v39 = vld [vmem:[%s1 + $0x48] sm:$0xff]
  %v40 = vld [vmem:[%s1 + $0x50] sm:$0xff]
  %v41 = vld [vmem:[%s1 + $0x58] sm:$0xff]
  %v42 = vld [vmem:[%s1 + $0x60] sm:$0xff]
  %v43 = vld [vmem:[%s1 + $0x68] sm:$0xff]
  %v44 = vld [vmem:[%s1 + $0x70] sm:$0xff]
  %v45 = vld [vmem:[%s1 + $0x78] sm:$0xff]
  %v46 = vld [vmem:[%s1 + $0x80] sm:$0xff]
  %v47 = vld [vmem:[%s1 + $0x88] sm:$0xff]
  %v48 = vld [vmem:[%s1 + $0x90] sm:$0xff]
  %v49 = vld [vmem:[%s1 + $0x98] sm:$0xff]
  %v50 = vld [vmem:[%s1 + $0xa0] sm:$0xff]
  %v51 = vld [vmem:[%s1 + $0xa8] sm:$0xff]
  %v52 = vld [vmem:[%s1 + $0xb0] sm:$0xff]
  %v53 = vld [vmem:[%s1 + $0xb8] sm:$0xff]
  %v54 = vld [vmem:[%s1 + $0xc0] sm:$0xff]
  %v55 = vld [vmem:[%s1 + $0xc8] sm:$0xff]
  %v56 = vld [vmem:[%s1 + $0xd0] sm:$0xff]
  %v57 = vld [vmem:[%s1 + $0xd8] sm:$0xff]
  %v58 = vld [vmem:[%s1 + $0xe0] sm:$0xff]
  %v59 = vld [vmem:[%s1 + $0xe8] sm:$0xff]
  %v60 = vld [vmem:[%s1 + $0xf0] sm:$0xff]
  %v61 = vld [vmem:[%s1 + $0xf8] sm:$0xff]
  %v62 = vld [vmem:[%s1 + $0x100] sm:$0xff]
  %v63 = vld [vmem:[%s1 + $0x108] sm:$0xff]
  %v64 = vld [vmem:[%s1 + $0x110] sm:$0xff]
  %v65 = vld [vmem:[%s1 + $0x118] sm:$0xff]
  %v66 = vld [vmem:[%s1 + $0x120] sm:$0xff]
  %v67 = vld [vmem:[%s1 + $0x128] sm:$0xff]
  %v68 = vld [vmem:[%s1 + $0x130] sm:$0xff]
  %v69 = vld [vmem:[%s1 + $0x138] sm:$0xff]
  %v70 = vld [vmem:[%s1 + $0x140] sm:$0xff]
  %v71 = vld [vmem:[%s1 + $0x148] sm:$0xff]
  %v72 = vld [vmem:[%s1 + $0x150] sm:$0xff]
  %v73 = vld [vmem:[%s1 + $0x158] sm:$0xff]
  %v74 = vld [vmem:[%s1 + $0x160] sm:$0xff]
  %v75 = vld [vmem:[%s1 + $0x168] sm:$0xff]
  %v76 = vld [vmem:[%s1 + $0x170] sm:$0xff]
  %v77 = vld [vmem:[%s1 + $0x178] sm:$0xff]
  %v78 = vld [vmem:[%s1 + $0x180] sm:$0xff]
  %v79 = vld [vmem:[%s1 + $0x188] sm:$0xff]
  %v80 = vld [vmem:[%s2] sm:$0x1]
  %v82 = vperm.slane %v80, 0
  %vm84 = vcmask 130048
  %v86 = vsel %vm84, %v29, 0
  %88 = vmatpush.msra.mxu0 %v45
  %89 = vmatpush.msra.mxu0 %v44
  %90 = vmatpush.msra.mxu0 %v43
  %91 = vmatpush.msra.mxu0 %v42
  %92 = vmatpush.msra.mxu0 %v41
  %93 = vmatpush.msra.mxu0 %v40
  %94 = vmatpush.msra.mxu0 %v39
  %95 = vmatpush.msra.mxu0 %v38
  %96 = vmatpush.msra.mxu0 %v37
  %97 = vmatpush.msra.mxu0 %v36
  %98 = vmatpush.msra.mxu0 %v35
  %99 = vmatpush.msra.mxu0 %v34
  %100 = vmatpush.msra.mxu0 %v33
  %101 = vmatpush.msra.mxu0 %v32
  %102 = vmatpush.msra.mxu0 %v31
  %103 = vmatpush.msra.mxu0 %v30
  %104 = vmatmul.f32.gmra.mxu0 %v26
  %v105 = vpop.f32.mrf.mxu0
  %v106 = vadd.f32 %v82, %v105
  %107 = vdwg.mxu0
  %108 = vmatpush.msra.mxu0 %v61
  %109 = vmatpush.msra.mxu0 %v60
  %110 = vmatpush.msra.mxu0 %v59
  %111 = vmatpush.msra.mxu0 %v58
  %112 = vmatpush.msra.mxu0 %v57
  %113 = vmatpush.msra.mxu0 %v56
  %114 = vmatpush.msra.mxu0 %v55
  %115 = vmatpush.msra.mxu0 %v54
  %116 = vmatpush.msra.mxu0 %v53
  %117 = vmatpush.msra.mxu0 %v52
  %118 = vmatpush.msra.mxu0 %v51
  %119 = vmatpush.msra.mxu0 %v50
  %120 = vmatpush.msra.mxu0 %v49
  %121 = vmatpush.msra.mxu0 %v48
  %122 = vmatpush.msra.mxu0 %v47
  %123 = vmatpush.msra.mxu0 %v46
  %124 = vmatmul.f32.gmra.mxu0 %v27
  %v125 = vpop.f32.mrf.mxu0
  %v126 = vadd.f32 %v106, %v125
  %127 = vdwg.mxu0
  %128 = vmatpush.msra.mxu0 %v77
  %129 = vmatpush.msra.mxu0 %v76
  %130 = vmatpush.msra.mxu0 %v75
  %131 = vmatpush.msra.mxu0 %v74
  %132 = vmatpush.msra.mxu0 %v73
  %133 = vmatpush.msra.mxu0 %v72
  %134 = vmatpush.msra.mxu0 %v71
  %135 = vmatpush.msra.mxu0 %v70
  %136 = vmatpush.msra.mxu0 %v69
  %137 = vmatpush.msra.mxu0 %v68
  %138 = vmatpush.msra.mxu0 %v67
  %139 = vmatpush.msra.mxu0 %v66
  %140 = vmatpush.msra.mxu0 %v65
  %141 = vmatpush.msra.mxu0 %v64
  %142 = vmatpush.msra.mxu0 %v63
  %143 = vmatpush.msra.mxu0 %v62
  %144 = vmatmul.f32.gmra.mxu0 %v28
  %v145 = vpop.f32.mrf.mxu0
  %v146 = vadd.f32 %v126, %v145
  %147 = vdwg.mxu0
  %148 = vmatpush.msra.mxu0 0.0
  %149 = vmatpush.msra.mxu0 0.0
  %150 = vmatpush.msra.mxu0 0.0
  %151 = vmatpush.msra.mxu0 0.0
  %152 = vmatpush.msra.mxu0 0.0
  %153 = vmatpush.msra.mxu0 0.0
  %154 = vmatpush.msra.mxu0 0.0
  %155 = vmatpush.msra.mxu0 0.0
  %156 = vmatpush.msra.mxu0 0.0
  %157 = vmatpush.msra.mxu0 0.0
  %158 = vmatpush.msra.mxu0 0.0
  %159 = vmatpush.msra.mxu0 0.0
  %160 = vmatpush.msra.mxu0 0.0
  %161 = vmatpush.msra.mxu0 0.0
  %162 = vmatpush.msra.mxu0 %v79
  %163 = vmatpush.msra.mxu0 %v78
  %164 = vmatmul.f32.gmra.mxu0 %v86
  %v165 = vpop.f32.mrf.mxu0
  %v166 = vadd.f32 %v146, %v165
  %167 = vdwg.mxu0
  %v168 = vmax.f32 %v166, 0.0
  %v169 = vld [vmem:[%s3] sm:$0xff]
  %v170 = vld [vmem:[%s3 + $0x8] sm:$0xff]
  %v171 = vld [vmem:[%s3 + $0x10] sm:$0xff]
  %v172 = vld [vmem:[%s3 + $0x18] sm:$0xff]
  %v173 = vld [vmem:[%s3 + $0x20] sm:$0xff]
  %v174 = vld [vmem:[%s3 + $0x28] sm:$0xff]
  %v175 = vld [vmem:[%s3 + $0x30] sm:$0xff]
  %v176 = vld [vmem:[%s3 + $0x38] sm:$0xff]
  %v177 = vld [vmem:[%s3 + $0x40] sm:$0xff]
  %v178 = vld [vmem:[%s3 + $0x48] sm:$0xff]
  %v179 = vld [vmem:[%s3 + $0x50] sm:$0xff]
  %v180 = vld [vmem:[%s3 + $0x58] sm:$0xff]
  %v181 = vld [vmem:[%s3 + $0x60] sm:$0xff]
  %v182 = vld [vmem:[%s3 + $0x68] sm:$0xff]
  %v183 = vld [vmem:[%s3 + $0x70] sm:$0xff]
  %v184 = vld [vmem:[%s4] sm:$0x1]
  %v186 = vperm.slane %v184, 0
  %vm188 = vcmask 982016
  %v190 = vsel %vm188, %v168, 0
  %192 = vmatpush.msra.mxu0 0.0
  %193 = vmatpush.msra.mxu0 %v183
  %194 = vmatpush.msra.mxu0 %v182
  %195 = vmatpush.msra.mxu0 %v181
  %196 = vmatpush.msra.mxu0 %v180
  %197 = vmatpush.msra.mxu0 %v179
  %198 = vmatpush.msra.mxu0 %v178
  %199 = vmatpush.msra.mxu0 %v177
  %200 = vmatpush.msra.mxu0 %v176
  %201 = vmatpush.msra.mxu0 %v175
  %202 = vmatpush.msra.mxu0 %v174
  %203 = vmatpush.msra.mxu0 %v173
  %204 = vmatpush.msra.mxu0 %v172
  %205 = vmatpush.msra.mxu0 %v171
  %206 = vmatpush.msra.mxu0 %v170
  %207 = vmatpush.msra.mxu0 %v169
  %208 = vmatmul.f32.gmra.mxu0 %v190
  %v209 = vpop.f32.mrf.mxu0
  %v210 = vadd.f32 %v186, %v209
  %211 = vdwg.mxu0
  %v212 = vmax.f32 %v210, 0.0
  %v213 = vld [vmem:[%s5] sm:$0xff]
  %v214 = vld [vmem:[%s5 + $0x8] sm:$0xff]
  %v215 = vld [vmem:[%s5 + $0x10] sm:$0xff]
  %v216 = vld [vmem:[%s5 + $0x18] sm:$0xff]
  %v217 = vld [vmem:[%s5 + $0x20] sm:$0xff]
  %v218 = vld [vmem:[%s5 + $0x28] sm:$0xff]
  %v219 = vld [vmem:[%s5 + $0x30] sm:$0xff]
  %v220 = vld [vmem:[%s5 + $0x38] sm:$0xff]
  %v221 = vld [vmem:[%s5 + $0x40] sm:$0xff]
  %v222 = vld [vmem:[%s5 + $0x48] sm:$0xff]
  %v223 = vld [vmem:[%s5 + $0x50] sm:$0xf]
  %v224 = vld [vmem:[%s6] sm:$0x1]
  %v226 = vperm.slane %v224, 0
  %vm228 = vcmask 687104
  %v230 = vsel %vm228, %v212, 0
  %vm232 = vcmask 1043456
  %v234 = vsel %vm232, %v223, 0
  %236 = vmatpush.msra.mxu0 0.0
  %237 = vmatpush.msra.mxu0 0.0
  %238 = vmatpush.msra.mxu0 0.0
  %239 = vmatpush.msra.mxu0 0.0
  %240 = vmatpush.msra.mxu0 0.0
  %241 = vmatpush.msra.mxu0 %v234
  %242 = vmatpush.msra.mxu0 %v222
  %243 = vmatpush.msra.mxu0 %v221
  %244 = vmatpush.msra.mxu0 %v220
  %245 = vmatpush.msra.mxu0 %v219
  %246 = vmatpush.msra.mxu0 %v218
  %247 = vmatpush.msra.mxu0 %v217
  %248 = vmatpush.msra.mxu0 %v216
  %249 = vmatpush.msra.mxu0 %v215
  %250 = vmatpush.msra.mxu0 %v214
  %251 = vmatpush.msra.mxu0 %v213
  %252 = vmatmul.f32.gmra.mxu0 %v230
  %v253 = vpop.f32.mrf.mxu0
  %v254 = vadd.f32 %v226, %v253
  %255 = vdwg.mxu0
  %256 = vst [vmem:[%s7] sm:$0xff] %v254
  // Predicated region
  $region30: #{net_forward.5} parent=0 // pred_check
    _
  $region31: #{net_forward.5} parent=0 // pred_check_branch
    %258 = sbr.rel (0) target = $region33
  $region32: #{net_forward.5} parent=0 // pred_region
    _
  $region33: #{net_forward.5} parent=0 // pred_fallthru
    _
  // Predicated region
  $region34: #{net_forward.5} parent=0 // pred_check
    _
  $region35: #{net_forward.5} parent=0 // pred_check_branch
    %260 = sbr.rel (0) target = $region37
  $region36: #{net_forward.5} parent=0 // pred_region
    _
  $region37: #{net_forward.5} parent=0 // pred_fallthru
    _

</llo_original>
